<compile_context>
chip_gen: v7x
topology: tpu7x:2x2x1
jax: 0.10.0
libtpu: 0.0.40
codegen_flags: <defaults>
</compile_context>

<pallas_src>
import jax
import jax.numpy as jnp
from jax.experimental import pallas as pl
from jax.experimental.pallas import tpu as pltpu

LANE = 128


def _round_up(n, m):
    return ((n + m - 1) // m) * m


def fc10_kernel(x_ref, *refs):
    """Fused 11-layer MLP: 10x (matmul + bias + ReLU), then matmul + bias (no act)."""
    o_ref = refs[-1]
    wb_refs = refs[:-1]
    n_layers = len(wb_refs) // 2

    # bf16 activations feed the MXU at full rate; f32 accumulation + f32 bias add.
    h = x_ref[...].astype(jnp.bfloat16)
    for i in range(n_layers):
        w = wb_refs[2 * i][...]          # bf16 [din_pad, dout_pad]
        b = wb_refs[2 * i + 1][...]      # f32  [1, dout_pad]
        acc = jnp.dot(h, w, preferred_element_type=jnp.float32) + b
        if i < n_layers - 1:
            h = jnp.maximum(acc, 0.0).astype(jnp.bfloat16)
        else:
            o_ref[...] = acc.astype(o_ref.dtype)
    # TODO(synk): dropout with p>0 would need pltpu.prng_seed/prng_random_bits masking
    # inside the kernel; with p=0.0 (this config / eval mode) it is exactly the identity.


def fc10_forward(x, weights, biases, *, batch_tile=None):
    """x: [B, in_features] f32. weights[i]: [fan_in, fan_out]; biases[i]: [fan_out]."""
    B, in_features = x.shape
    n_layers = len(weights)
    out_features = weights[-1].shape[1]

    # --- lane-dense padding of every feature dim to a multiple of 128 ---------------
    dims = [in_features] + [w.shape[1] for w in weights]
    pdims = [_round_up(d, LANE) for d in dims]

    x_p = jnp.pad(x.astype(jnp.float32), ((0, 0), (0, pdims[0] - in_features)))

    w_p, b_p = [], []
    for i, (w, b) in enumerate(zip(weights, biases)):
        wp = jnp.pad(w, ((0, pdims[i] - w.shape[0]), (0, pdims[i + 1] - w.shape[1])))
        bp = jnp.pad(b.reshape(1, -1), ((0, 0), (0, pdims[i + 1] - b.shape[-1])))
        w_p.append(wp.astype(jnp.bfloat16))     # bf16 MXU operands
        b_p.append(bp.astype(jnp.float32))      # f32 bias add

    # --- batch tiling: one fat tile for small B, 128-row multiples otherwise --------
    if batch_tile is None:
        batch_tile = _round_up(B, 8) if B <= 256 else 128
    Bp = _round_up(B, batch_tile)
    if Bp != B:
        x_p = jnp.pad(x_p, ((0, Bp - B), (0, 0)))
    grid = (Bp // batch_tile,)

    # Weights/biases are grid-invariant -> resident in VMEM across all batch tiles.
    def full(shape):
        return pl.BlockSpec(shape, lambda i: (0, 0))

    in_specs = [pl.BlockSpec((batch_tile, pdims[0]), lambda i: (i, 0))]
    operands = [x_p]
    for i in range(n_layers):
        in_specs.append(full((pdims[i], pdims[i + 1])))
        in_specs.append(full((1, pdims[i + 1])))
        operands.append(w_p[i])
        operands.append(b_p[i])

    flops = 2 * Bp * sum(pdims[i] * pdims[i + 1] for i in range(n_layers))
    bytes_accessed = (
        x_p.size * x_p.dtype.itemsize
        + sum(w.size * w.dtype.itemsize for w in w_p)
        + sum(b.size * b.dtype.itemsize for b in b_p)
        + Bp * pdims[-1] * 4)

    out_p = pl.pallas_call(
        fc10_kernel,
        out_shape=jax.ShapeDtypeStruct((Bp, pdims[-1]), jnp.float32),
        grid_spec=pltpu.PrefetchScalarGridSpec(
            num_scalar_prefetch=0,
            grid=grid,
            in_specs=in_specs,
            out_specs=pl.BlockSpec((batch_tile, pdims[-1]), lambda i: (i, 0)),
        ),
        compiler_params=pltpu.CompilerParams(
            dimension_semantics=("parallel",)),
        cost_estimate=pl.CostEstimate(
            flops=flops, transcendentals=0, bytes_accessed=bytes_accessed),
    )(*operands)

    # Slice off batch padding and the lane padding of the output features.
    return out_p[:B, :out_features]


def init_params(key, dims):
    """nn.Linear-style init U(-1/sqrt(fan_in), 1/sqrt(fan_in)); weights stored [fan_in, fan_out]."""
    weights, biases = [], []
    for fan_in, fan_out in zip(dims[:-1], dims[1:]):
        key, kw, kb = jax.random.split(key, 3)
        bound = 1.0 / float(fan_in) ** 0.5
        weights.append(jax.random.uniform(kw, (fan_in, fan_out), jnp.float32, -bound, bound))
        biases.append(jax.random.uniform(kb, (fan_out,), jnp.float32, -bound, bound))
    return weights, biases


def fc10_reference(x, weights, biases, *, bf16=True):
    """Pure-JAX reference; bf16=True matches the kernel's bf16-operand / f32-accum path."""
    h = x
    n = len(weights)
    for i, (w, b) in enumerate(zip(weights, biases)):
        if bf16:
            h = jnp.dot(h.astype(jnp.bfloat16), w.astype(jnp.bfloat16),
                        preferred_element_type=jnp.float32) + b
        else:
            h = jnp.dot(h, w) + b
        if i < n - 1:
            h = jnp.maximum(h, 0.0)
    return h


if __name__ == "__main__":
    # Small shapes consistent with the module: batch=16, in=32, ten hidden dims, out=16.
    B, IN, OUT = 16, 32, 16
    HIDDEN = [64, 48, 56, 64, 40, 64, 48, 56, 64, 40]

    key = jax.random.PRNGKey(0)
    key, kx = jax.random.split(key)
    x = jax.random.normal(kx, (B, IN), jnp.float32)
    weights, biases = init_params(key, [IN] + HIDDEN + [OUT])

    out = fc10_forward(x, weights, biases)
    out = jax.block_until_ready(out)
    assert out.shape == (B, OUT)

    # Reference using the same bf16-operand / f32-accumulation arithmetic as the kernel.
    ref = fc10_reference(x, weights, biases, bf16=True)
    assert jnp.allclose(out, ref, atol=5e-3, rtol=5e-3), "mismatch vs reference"

    print("KERNEL_OK")
</pallas_src>

<mosaic_0001>
module attributes {stable_mosaic.version = 11 : i64} {
  func.func @fc10_kernel(%arg0: i32, %arg1: memref<16x128xf32, #tpu.memory_space<vmem>>, %arg2: memref<128x128xbf16, #tpu.memory_space<vmem>>, %arg3: memref<1x128xf32, #tpu.memory_space<vmem>>, %arg4: memref<128x128xbf16, #tpu.memory_space<vmem>>, %arg5: memref<1x128xf32, #tpu.memory_space<vmem>>, %arg6: memref<128x128xbf16, #tpu.memory_space<vmem>>, %arg7: memref<1x128xf32, #tpu.memory_space<vmem>>, %arg8: memref<128x128xbf16, #tpu.memory_space<vmem>>, %arg9: memref<1x128xf32, #tpu.memory_space<vmem>>, %arg10: memref<128x128xbf16, #tpu.memory_space<vmem>>, %arg11: memref<1x128xf32, #tpu.memory_space<vmem>>, %arg12: memref<128x128xbf16, #tpu.memory_space<vmem>>, %arg13: memref<1x128xf32, #tpu.memory_space<vmem>>, %arg14: memref<128x128xbf16, #tpu.memory_space<vmem>>, %arg15: memref<1x128xf32, #tpu.memory_space<vmem>>, %arg16: memref<128x128xbf16, #tpu.memory_space<vmem>>, %arg17: memref<1x128xf32, #tpu.memory_space<vmem>>, %arg18: memref<128x128xbf16, #tpu.memory_space<vmem>>, %arg19: memref<1x128xf32, #tpu.memory_space<vmem>>, %arg20: memref<128x128xbf16, #tpu.memory_space<vmem>>, %arg21: memref<1x128xf32, #tpu.memory_space<vmem>>, %arg22: memref<128x128xbf16, #tpu.memory_space<vmem>>, %arg23: memref<1x128xf32, #tpu.memory_space<vmem>>, %arg24: memref<16x128xf32, #tpu.memory_space<vmem>>) attributes {dimension_semantics = [#tpu.dimension_semantics<parallel>], iteration_bounds = array<i64: 1>, scalar_prefetch = 0 : i64, scratch_operands = 0 : i64, tpu.core_type = #tpu.core_type<tc>, window_params = [{transform_indices = @transform_0, window_bounds = array<i64: 16, 128>}, {pipeline_mode = #tpu.pipeline_mode<synchronous>, transform_indices = @transform_1, window_bounds = array<i64: 128, 128>}, {pipeline_mode = #tpu.pipeline_mode<synchronous>, transform_indices = @transform_2, window_bounds = array<i64: 1, 128>}, {pipeline_mode = #tpu.pipeline_mode<synchronous>, transform_indices = @transform_3, window_bounds = array<i64: 128, 128>}, {pipeline_mode = #tpu.pipeline_mode<synchronous>, transform_indices = @transform_4, window_bounds = array<i64: 1, 128>}, {pipeline_mode = #tpu.pipeline_mode<synchronous>, transform_indices = @transform_5, window_bounds = array<i64: 128, 128>}, {pipeline_mode = #tpu.pipeline_mode<synchronous>, transform_indices = @transform_6, window_bounds = array<i64: 1, 128>}, {pipeline_mode = #tpu.pipeline_mode<synchronous>, transform_indices = @transform_7, window_bounds = array<i64: 128, 128>}, {pipeline_mode = #tpu.pipeline_mode<synchronous>, transform_indices = @transform_8, window_bounds = array<i64: 1, 128>}, {pipeline_mode = #tpu.pipeline_mode<synchronous>, transform_indices = @transform_9, window_bounds = array<i64: 128, 128>}, {pipeline_mode = #tpu.pipeline_mode<synchronous>, transform_indices = @transform_10, window_bounds = array<i64: 1, 128>}, {pipeline_mode = #tpu.pipeline_mode<synchronous>, transform_indices = @transform_11, window_bounds = array<i64: 128, 128>}, {pipeline_mode = #tpu.pipeline_mode<synchronous>, transform_indices = @transform_12, window_bounds = array<i64: 1, 128>}, {pipeline_mode = #tpu.pipeline_mode<synchronous>, transform_indices = @transform_13, window_bounds = array<i64: 128, 128>}, {pipeline_mode = #tpu.pipeline_mode<synchronous>, transform_indices = @transform_14, window_bounds = array<i64: 1, 128>}, {pipeline_mode = #tpu.pipeline_mode<synchronous>, transform_indices = @transform_15, window_bounds = array<i64: 128, 128>}, {pipeline_mode = #tpu.pipeline_mode<synchronous>, transform_indices = @transform_16, window_bounds = array<i64: 1, 128>}, {pipeline_mode = #tpu.pipeline_mode<synchronous>, transform_indices = @transform_17, window_bounds = array<i64: 128, 128>}, {pipeline_mode = #tpu.pipeline_mode<synchronous>, transform_indices = @transform_18, window_bounds = array<i64: 1, 128>}, {pipeline_mode = #tpu.pipeline_mode<synchronous>, transform_indices = @transform_19, window_bounds = array<i64: 128, 128>}, {pipeline_mode = #tpu.pipeline_mode<synchronous>, transform_indices = @transform_20, window_bounds = array<i64: 1, 128>}, {pipeline_mode = #tpu.pipeline_mode<synchronous>, transform_indices = @transform_21, window_bounds = array<i64: 128, 128>}, {pipeline_mode = #tpu.pipeline_mode<synchronous>, transform_indices = @transform_22, window_bounds = array<i64: 1, 128>}, {transform_indices = @transform_23, window_bounds = array<i64: 16, 128>}]} {
    %c0 = arith.constant 0 : index
    %c0_0 = arith.constant 0 : index
    %0 = vector.load %arg1[%c0, %c0_0] : memref<16x128xf32, #tpu.memory_space<vmem>>, vector<16x128xf32>
    %1 = arith.truncf %0 : vector<16x128xf32> to vector<16x128xbf16>
    %c0_1 = arith.constant 0 : index
    %c0_2 = arith.constant 0 : index
    %2 = vector.load %arg2[%c0_1, %c0_2] : memref<128x128xbf16, #tpu.memory_space<vmem>>, vector<128x128xbf16>
    %c0_3 = arith.constant 0 : index
    %c0_4 = arith.constant 0 : index
    %3 = vector.load %arg3[%c0_3, %c0_4] : memref<1x128xf32, #tpu.memory_space<vmem>>, vector<1x128xf32>
    %cst = arith.constant dense<0.000000e+00> : vector<16x128xf32>
    %4 = tpu.matmul %1, %2, %cst {dimension_numbers = #tpu.dot_dimension_numbers<[1], [0], [0], [1], [0, 0, 1, 1], [], []>} : vector<16x128xbf16>, vector<128x128xbf16>, vector<16x128xf32> -> vector<16x128xf32>
    %5 = vector.broadcast %3 : vector<1x128xf32> to vector<16x128xf32>
    %6 = arith.addf %4, %5 : vector<16x128xf32>
    %cst_5 = arith.constant 0.000000e+00 : f32
    %7 = vector.broadcast %cst_5 : f32 to vector<16x128xf32>
    %8 = arith.maximumf %6, %7 : vector<16x128xf32>
    %9 = arith.truncf %8 : vector<16x128xf32> to vector<16x128xbf16>
    %c0_6 = arith.constant 0 : index
    %c0_7 = arith.constant 0 : index
    %10 = vector.load %arg4[%c0_6, %c0_7] : memref<128x128xbf16, #tpu.memory_space<vmem>>, vector<128x128xbf16>
    %c0_8 = arith.constant 0 : index
    %c0_9 = arith.constant 0 : index
    %11 = vector.load %arg5[%c0_8, %c0_9] : memref<1x128xf32, #tpu.memory_space<vmem>>, vector<1x128xf32>
    %cst_10 = arith.constant dense<0.000000e+00> : vector<16x128xf32>
    %12 = tpu.matmul %9, %10, %cst_10 {dimension_numbers = #tpu.dot_dimension_numbers<[1], [0], [0], [1], [0, 0, 1, 1], [], []>} : vector<16x128xbf16>, vector<128x128xbf16>, vector<16x128xf32> -> vector<16x128xf32>
    %13 = vector.broadcast %11 : vector<1x128xf32> to vector<16x128xf32>
    %14 = arith.addf %12, %13 : vector<16x128xf32>
    %cst_11 = arith.constant 0.000000e+00 : f32
    %15 = vector.broadcast %cst_11 : f32 to vector<16x128xf32>
    %16 = arith.maximumf %14, %15 : vector<16x128xf32>
    %17 = arith.truncf %16 : vector<16x128xf32> to vector<16x128xbf16>
    %c0_12 = arith.constant 0 : index
    %c0_13 = arith.constant 0 : index
    %18 = vector.load %arg6[%c0_12, %c0_13] : memref<128x128xbf16, #tpu.memory_space<vmem>>, vector<128x128xbf16>
    %c0_14 = arith.constant 0 : index
    %c0_15 = arith.constant 0 : index
    %19 = vector.load %arg7[%c0_14, %c0_15] : memref<1x128xf32, #tpu.memory_space<vmem>>, vector<1x128xf32>
    %cst_16 = arith.constant dense<0.000000e+00> : vector<16x128xf32>
    %20 = tpu.matmul %17, %18, %cst_16 {dimension_numbers = #tpu.dot_dimension_numbers<[1], [0], [0], [1], [0, 0, 1, 1], [], []>} : vector<16x128xbf16>, vector<128x128xbf16>, vector<16x128xf32> -> vector<16x128xf32>
    %21 = vector.broadcast %19 : vector<1x128xf32> to vector<16x128xf32>
    %22 = arith.addf %20, %21 : vector<16x128xf32>
    %cst_17 = arith.constant 0.000000e+00 : f32
    %23 = vector.broadcast %cst_17 : f32 to vector<16x128xf32>
    %24 = arith.maximumf %22, %23 : vector<16x128xf32>
    %25 = arith.truncf %24 : vector<16x128xf32> to vector<16x128xbf16>
    %c0_18 = arith.constant 0 : index
    %c0_19 = arith.constant 0 : index
    %26 = vector.load %arg8[%c0_18, %c0_19] : memref<128x128xbf16, #tpu.memory_space<vmem>>, vector<128x128xbf16>
    %c0_20 = arith.constant 0 : index
    %c0_21 = arith.constant 0 : index
    %27 = vector.load %arg9[%c0_20, %c0_21] : memref<1x128xf32, #tpu.memory_space<vmem>>, vector<1x128xf32>
    %cst_22 = arith.constant dense<0.000000e+00> : vector<16x128xf32>
    %28 = tpu.matmul %25, %26, %cst_22 {dimension_numbers = #tpu.dot_dimension_numbers<[1], [0], [0], [1], [0, 0, 1, 1], [], []>} : vector<16x128xbf16>, vector<128x128xbf16>, vector<16x128xf32> -> vector<16x128xf32>
    %29 = vector.broadcast %27 : vector<1x128xf32> to vector<16x128xf32>
    %30 = arith.addf %28, %29 : vector<16x128xf32>
    %cst_23 = arith.constant 0.000000e+00 : f32
    %31 = vector.broadcast %cst_23 : f32 to vector<16x128xf32>
    %32 = arith.maximumf %30, %31 : vector<16x128xf32>
    %33 = arith.truncf %32 : vector<16x128xf32> to vector<16x128xbf16>
    %c0_24 = arith.constant 0 : index
    %c0_25 = arith.constant 0 : index
    %34 = vector.load %arg10[%c0_24, %c0_25] : memref<128x128xbf16, #tpu.memory_space<vmem>>, vector<128x128xbf16>
    %c0_26 = arith.constant 0 : index
    %c0_27 = arith.constant 0 : index
    %35 = vector.load %arg11[%c0_26, %c0_27] : memref<1x128xf32, #tpu.memory_space<vmem>>, vector<1x128xf32>
    %cst_28 = arith.constant dense<0.000000e+00> : vector<16x128xf32>
    %36 = tpu.matmul %33, %34, %cst_28 {dimension_numbers = #tpu.dot_dimension_numbers<[1], [0], [0], [1], [0, 0, 1, 1], [], []>} : vector<16x128xbf16>, vector<128x128xbf16>, vector<16x128xf32> -> vector<16x128xf32>
    %37 = vector.broadcast %35 : vector<1x128xf32> to vector<16x128xf32>
    %38 = arith.addf %36, %37 : vector<16x128xf32>
    %cst_29 = arith.constant 0.000000e+00 : f32
    %39 = vector.broadcast %cst_29 : f32 to vector<16x128xf32>
    %40 = arith.maximumf %38, %39 : vector<16x128xf32>
    %41 = arith.truncf %40 : vector<16x128xf32> to vector<16x128xbf16>
    %c0_30 = arith.constant 0 : index
    %c0_31 = arith.constant 0 : index
    %42 = vector.load %arg12[%c0_30, %c0_31] : memref<128x128xbf16, #tpu.memory_space<vmem>>, vector<128x128xbf16>
    %c0_32 = arith.constant 0 : index
    %c0_33 = arith.constant 0 : index
    %43 = vector.load %arg13[%c0_32, %c0_33] : memref<1x128xf32, #tpu.memory_space<vmem>>, vector<1x128xf32>
    %cst_34 = arith.constant dense<0.000000e+00> : vector<16x128xf32>
    %44 = tpu.matmul %41, %42, %cst_34 {dimension_numbers = #tpu.dot_dimension_numbers<[1], [0], [0], [1], [0, 0, 1, 1], [], []>} : vector<16x128xbf16>, vector<128x128xbf16>, vector<16x128xf32> -> vector<16x128xf32>
    %45 = vector.broadcast %43 : vector<1x128xf32> to vector<16x128xf32>
    %46 = arith.addf %44, %45 : vector<16x128xf32>
    %cst_35 = arith.constant 0.000000e+00 : f32
    %47 = vector.broadcast %cst_35 : f32 to vector<16x128xf32>
    %48 = arith.maximumf %46, %47 : vector<16x128xf32>
    %49 = arith.truncf %48 : vector<16x128xf32> to vector<16x128xbf16>
    %c0_36 = arith.constant 0 : index
    %c0_37 = arith.constant 0 : index
    %50 = vector.load %arg14[%c0_36, %c0_37] : memref<128x128xbf16, #tpu.memory_space<vmem>>, vector<128x128xbf16>
    %c0_38 = arith.constant 0 : index
    %c0_39 = arith.constant 0 : index
    %51 = vector.load %arg15[%c0_38, %c0_39] : memref<1x128xf32, #tpu.memory_space<vmem>>, vector<1x128xf32>
    %cst_40 = arith.constant dense<0.000000e+00> : vector<16x128xf32>
    %52 = tpu.matmul %49, %50, %cst_40 {dimension_numbers = #tpu.dot_dimension_numbers<[1], [0], [0], [1], [0, 0, 1, 1], [], []>} : vector<16x128xbf16>, vector<128x128xbf16>, vector<16x128xf32> -> vector<16x128xf32>
    %53 = vector.broadcast %51 : vector<1x128xf32> to vector<16x128xf32>
    %54 = arith.addf %52, %53 : vector<16x128xf32>
    %cst_41 = arith.constant 0.000000e+00 : f32
    %55 = vector.broadcast %cst_41 : f32 to vector<16x128xf32>
    %56 = arith.maximumf %54, %55 : vector<16x128xf32>
    %57 = arith.truncf %56 : vector<16x128xf32> to vector<16x128xbf16>
    %c0_42 = arith.constant 0 : index
    %c0_43 = arith.constant 0 : index
    %58 = vector.load %arg16[%c0_42, %c0_43] : memref<128x128xbf16, #tpu.memory_space<vmem>>, vector<128x128xbf16>
    %c0_44 = arith.constant 0 : index
    %c0_45 = arith.constant 0 : index
    %59 = vector.load %arg17[%c0_44, %c0_45] : memref<1x128xf32, #tpu.memory_space<vmem>>, vector<1x128xf32>
    %cst_46 = arith.constant dense<0.000000e+00> : vector<16x128xf32>
    %60 = tpu.matmul %57, %58, %cst_46 {dimension_numbers = #tpu.dot_dimension_numbers<[1], [0], [0], [1], [0, 0, 1, 1], [], []>} : vector<16x128xbf16>, vector<128x128xbf16>, vector<16x128xf32> -> vector<16x128xf32>
    %61 = vector.broadcast %59 : vector<1x128xf32> to vector<16x128xf32>
    %62 = arith.addf %60, %61 : vector<16x128xf32>
    %cst_47 = arith.constant 0.000000e+00 : f32
    %63 = vector.broadcast %cst_47 : f32 to vector<16x128xf32>
    %64 = arith.maximumf %62, %63 : vector<16x128xf32>
    %65 = arith.truncf %64 : vector<16x128xf32> to vector<16x128xbf16>
    %c0_48 = arith.constant 0 : index
    %c0_49 = arith.constant 0 : index
    %66 = vector.load %arg18[%c0_48, %c0_49] : memref<128x128xbf16, #tpu.memory_space<vmem>>, vector<128x128xbf16>
    %c0_50 = arith.constant 0 : index
    %c0_51 = arith.constant 0 : index
    %67 = vector.load %arg19[%c0_50, %c0_51] : memref<1x128xf32, #tpu.memory_space<vmem>>, vector<1x128xf32>
    %cst_52 = arith.constant dense<0.000000e+00> : vector<16x128xf32>
    %68 = tpu.matmul %65, %66, %cst_52 {dimension_numbers = #tpu.dot_dimension_numbers<[1], [0], [0], [1], [0, 0, 1, 1], [], []>} : vector<16x128xbf16>, vector<128x128xbf16>, vector<16x128xf32> -> vector<16x128xf32>
    %69 = vector.broadcast %67 : vector<1x128xf32> to vector<16x128xf32>
    %70 = arith.addf %68, %69 : vector<16x128xf32>
    %cst_53 = arith.constant 0.000000e+00 : f32
    %71 = vector.broadcast %cst_53 : f32 to vector<16x128xf32>
    %72 = arith.maximumf %70, %71 : vector<16x128xf32>
    %73 = arith.truncf %72 : vector<16x128xf32> to vector<16x128xbf16>
    %c0_54 = arith.constant 0 : index
    %c0_55 = arith.constant 0 : index
    %74 = vector.load %arg20[%c0_54, %c0_55] : memref<128x128xbf16, #tpu.memory_space<vmem>>, vector<128x128xbf16>
    %c0_56 = arith.constant 0 : index
    %c0_57 = arith.constant 0 : index
    %75 = vector.load %arg21[%c0_56, %c0_57] : memref<1x128xf32, #tpu.memory_space<vmem>>, vector<1x128xf32>
    %cst_58 = arith.constant dense<0.000000e+00> : vector<16x128xf32>
    %76 = tpu.matmul %73, %74, %cst_58 {dimension_numbers = #tpu.dot_dimension_numbers<[1], [0], [0], [1], [0, 0, 1, 1], [], []>} : vector<16x128xbf16>, vector<128x128xbf16>, vector<16x128xf32> -> vector<16x128xf32>
    %77 = vector.broadcast %75 : vector<1x128xf32> to vector<16x128xf32>
    %78 = arith.addf %76, %77 : vector<16x128xf32>
    %cst_59 = arith.constant 0.000000e+00 : f32
    %79 = vector.broadcast %cst_59 : f32 to vector<16x128xf32>
    %80 = arith.maximumf %78, %79 : vector<16x128xf32>
    %81 = arith.truncf %80 : vector<16x128xf32> to vector<16x128xbf16>
    %c0_60 = arith.constant 0 : index
    %c0_61 = arith.constant 0 : index
    %82 = vector.load %arg22[%c0_60, %c0_61] : memref<128x128xbf16, #tpu.memory_space<vmem>>, vector<128x128xbf16>
    %c0_62 = arith.constant 0 : index
    %c0_63 = arith.constant 0 : index
    %83 = vector.load %arg23[%c0_62, %c0_63] : memref<1x128xf32, #tpu.memory_space<vmem>>, vector<1x128xf32>
    %cst_64 = arith.constant dense<0.000000e+00> : vector<16x128xf32>
    %84 = tpu.matmul %81, %82, %cst_64 {dimension_numbers = #tpu.dot_dimension_numbers<[1], [0], [0], [1], [0, 0, 1, 1], [], []>} : vector<16x128xbf16>, vector<128x128xbf16>, vector<16x128xf32> -> vector<16x128xf32>
    %85 = vector.broadcast %83 : vector<1x128xf32> to vector<16x128xf32>
    %86 = arith.addf %84, %85 : vector<16x128xf32>
    %c0_65 = arith.constant 0 : index
    %c0_66 = arith.constant 0 : index
    %87 = vector.load %arg24[%c0_65, %c0_66] : memref<16x128xf32, #tpu.memory_space<vmem>>, vector<16x128xf32>
    tpu.vector_store %arg24[%c0_65, %c0_66], %86 {strides = array<i32>} : memref<16x128xf32, #tpu.memory_space<vmem>>, vector<16x128xf32>,
    return
  }
  func.func @transform_0(%arg0: i32) -> (i32, i32) {
    %c0_i32 = arith.constant 0 : i32
    %c0_i32_0 = arith.constant 0 : i32
    return %arg0, %c0_i32 : i32, i32
  }
  func.func @transform_1(%arg0: i32) -> (i32, i32) {
    %c0_i32 = arith.constant 0 : i32
    %c0_i32_0 = arith.constant 0 : i32
    %c0_i32_1 = arith.constant 0 : i32
    return %c0_i32, %c0_i32_0 : i32, i32
  }
  func.func @transform_2(%arg0: i32) -> (i32, i32) {
    %c0_i32 = arith.constant 0 : i32
    %c0_i32_0 = arith.constant 0 : i32
    %c0_i32_1 = arith.constant 0 : i32
    return %c0_i32, %c0_i32_0 : i32, i32
  }
  func.func @transform_3(%arg0: i32) -> (i32, i32) {
    %c0_i32 = arith.constant 0 : i32
    %c0_i32_0 = arith.constant 0 : i32
    %c0_i32_1 = arith.constant 0 : i32
    return %c0_i32, %c0_i32_0 : i32, i32
  }
  func.func @transform_4(%arg0: i32) -> (i32, i32) {
    %c0_i32 = arith.constant 0 : i32
    %c0_i32_0 = arith.constant 0 : i32
    %c0_i32_1 = arith.constant 0 : i32
    return %c0_i32, %c0_i32_0 : i32, i32
  }
  func.func @transform_5(%arg0: i32) -> (i32, i32) {
    %c0_i32 = arith.constant 0 : i32
    %c0_i32_0 = arith.constant 0 : i32
    %c0_i32_1 = arith.constant 0 : i32
    return %c0_i32, %c0_i32_0 : i32, i32
  }
  func.func @transform_6(%arg0: i32) -> (i32, i32) {
    %c0_i32 = arith.constant 0 : i32
    %c0_i32_0 = arith.constant 0 : i32
    %c0_i32_1 = arith.constant 0 : i32
    return %c0_i32, %c0_i32_0 : i32, i32
  }
  func.func @transform_7(%arg0: i32) -> (i32, i32) {
    %c0_i32 = arith.constant 0 : i32
    %c0_i32_0 = arith.constant 0 : i32
    %c0_i32_1 = arith.constant 0 : i32
    return %c0_i32, %c0_i32_0 : i32, i32
  }
  func.func @transform_8(%arg0: i32) -> (i32, i32) {
    %c0_i32 = arith.constant 0 : i32
    %c0_i32_0 = arith.constant 0 : i32
    %c0_i32_1 = arith.constant 0 : i32
    return %c0_i32, %c0_i32_0 : i32, i32
  }
  func.func @transform_9(%arg0: i32) -> (i32, i32) {
    %c0_i32 = arith.constant 0 : i32
    %c0_i32_0 = arith.constant 0 : i32
    %c0_i32_1 = arith.constant 0 : i32
    return %c0_i32, %c0_i32_0 : i32, i32
  }
  func.func @transform_10(%arg0: i32) -> (i32, i32) {
    %c0_i32 = arith.constant 0 : i32
    %c0_i32_0 = arith.constant 0 : i32
    %c0_i32_1 = arith.constant 0 : i32
    return %c0_i32, %c0_i32_0 : i32, i32
  }
  func.func @transform_11(%arg0: i32) -> (i32, i32) {
    %c0_i32 = arith.constant 0 : i32
    %c0_i32_0 = arith.constant 0 : i32
    %c0_i32_1 = arith.constant 0 : i32
    return %c0_i32, %c0_i32_0 : i32, i32
  }
  func.func @transform_12(%arg0: i32) -> (i32, i32) {
    %c0_i32 = arith.constant 0 : i32
    %c0_i32_0 = arith.constant 0 : i32
    %c0_i32_1 = arith.constant 0 : i32
    return %c0_i32, %c0_i32_0 : i32, i32
  }
  func.func @transform_13(%arg0: i32) -> (i32, i32) {
    %c0_i32 = arith.constant 0 : i32
    %c0_i32_0 = arith.constant 0 : i32
    %c0_i32_1 = arith.constant 0 : i32
    return %c0_i32, %c0_i32_0 : i32, i32
  }
  func.func @transform_14(%arg0: i32) -> (i32, i32) {
    %c0_i32 = arith.constant 0 : i32
    %c0_i32_0 = arith.constant 0 : i32
    %c0_i32_1 = arith.constant 0 : i32
    return %c0_i32, %c0_i32_0 : i32, i32
  }
  func.func @transform_15(%arg0: i32) -> (i32, i32) {
    %c0_i32 = arith.constant 0 : i32
    %c0_i32_0 = arith.constant 0 : i32
    %c0_i32_1 = arith.constant 0 : i32
    return %c0_i32, %c0_i32_0 : i32, i32
  }
  func.func @transform_16(%arg0: i32) -> (i32, i32) {
    %c0_i32 = arith.constant 0 : i32
    %c0_i32_0 = arith.constant 0 : i32
    %c0_i32_1 = arith.constant 0 : i32
    return %c0_i32, %c0_i32_0 : i32, i32
  }
  func.func @transform_17(%arg0: i32) -> (i32, i32) {
    %c0_i32 = arith.constant 0 : i32
    %c0_i32_0 = arith.constant 0 : i32
    %c0_i32_1 = arith.constant 0 : i32
    return %c0_i32, %c0_i32_0 : i32, i32
  }
  func.func @transform_18(%arg0: i32) -> (i32, i32) {
    %c0_i32 = arith.constant 0 : i32
    %c0_i32_0 = arith.constant 0 : i32
    %c0_i32_1 = arith.constant 0 : i32
    return %c0_i32, %c0_i32_0 : i32, i32
  }
  func.func @transform_19(%arg0: i32) -> (i32, i32) {
    %c0_i32 = arith.constant 0 : i32
    %c0_i32_0 = arith.constant 0 : i32
    %c0_i32_1 = arith.constant 0 : i32
    return %c0_i32, %c0_i32_0 : i32, i32
  }
  func.func @transform_20(%arg0: i32) -> (i32, i32) {
    %c0_i32 = arith.constant 0 : i32
    %c0_i32_0 = arith.constant 0 : i32
    %c0_i32_1 = arith.constant 0 : i32
    return %c0_i32, %c0_i32_0 : i32, i32
  }
  func.func @transform_21(%arg0: i32) -> (i32, i32) {
    %c0_i32 = arith.constant 0 : i32
    %c0_i32_0 = arith.constant 0 : i32
    %c0_i32_1 = arith.constant 0 : i32
    return %c0_i32, %c0_i32_0 : i32, i32
  }
  func.func @transform_22(%arg0: i32) -> (i32, i32) {
    %c0_i32 = arith.constant 0 : i32
    %c0_i32_0 = arith.constant 0 : i32
    %c0_i32_1 = arith.constant 0 : i32
    return %c0_i32, %c0_i32_0 : i32, i32
  }
  func.func @transform_23(%arg0: i32) -> (i32, i32) {
    %c0_i32 = arith.constant 0 : i32
    %c0_i32_0 = arith.constant 0 : i32
    return %arg0, %c0_i32 : i32, i32
  }
}

</mosaic_0001>

<llo_original>
// kernel: tpu_custom_call.1
$region0: #{tpu_custom_call.1}
  #allocation0 [shape = 'u32[]', space=smem, size = 0x4, offset = 0x4, fixed_abs, tag = 'smem constant byte address 0x4 - core index']
  #allocation1 [shape = 'u32[144,128]{1,0:T(1,128)}', space=vmem, size = 0x12000, scoped, tag = 'internal scratch']
  %s0 = inlined_call_operand.hbm [shape: f32[16,128], index: 0, kind: input, shape index: {}]
  %s1 = inlined_call_operand.hbm [shape: bf16[128,128], index: 1, kind: input, shape index: {}]
  %s2 = inlined_call_operand.hbm [shape: f32[1,128], index: 2, kind: input, shape index: {}]
  %s3 = inlined_call_operand.hbm [shape: bf16[128,128], index: 3, kind: input, shape index: {}]
  %s4 = inlined_call_operand.hbm [shape: f32[1,128], index: 4, kind: input, shape index: {}]
  %s5 = inlined_call_operand.hbm [shape: bf16[128,128], index: 5, kind: input, shape index: {}]
  %s6 = inlined_call_operand.hbm [shape: f32[1,128], index: 6, kind: input, shape index: {}]
  %s7 = inlined_call_operand.hbm [shape: bf16[128,128], index: 7, kind: input, shape index: {}]
  %s8 = inlined_call_operand.hbm [shape: f32[1,128], index: 8, kind: input, shape index: {}]
  %s9 = inlined_call_operand.hbm [shape: bf16[128,128], index: 9, kind: input, shape index: {}]
  %s10 = inlined_call_operand.hbm [shape: f32[1,128], index: 10, kind: input, shape index: {}]
  %s11 = inlined_call_operand.hbm [shape: bf16[128,128], index: 11, kind: input, shape index: {}]
  %s12 = inlined_call_operand.hbm [shape: f32[1,128], index: 12, kind: input, shape index: {}]
  %s13 = inlined_call_operand.hbm [shape: bf16[128,128], index: 13, kind: input, shape index: {}]
  %s14 = inlined_call_operand.hbm [shape: f32[1,128], index: 14, kind: input, shape index: {}]
  %s15 = inlined_call_operand.hbm [shape: bf16[128,128], index: 15, kind: input, shape index: {}]
  %s16 = inlined_call_operand.hbm [shape: f32[1,128], index: 16, kind: input, shape index: {}]
  %s17 = inlined_call_operand.vmem [shape: bf16[128,128], index: 17, kind: input, shape index: {}]
  %s18 = inlined_call_operand.vmem [shape: f32[1,128], index: 18, kind: input, shape index: {}]
  %s19 = inlined_call_operand.hbm [shape: bf16[128,128], index: 19, kind: input, shape index: {}]
  %s20 = inlined_call_operand.vmem [shape: f32[1,128], index: 20, kind: input, shape index: {}]
  %s21 = inlined_call_operand.hbm [shape: bf16[128,128], index: 21, kind: input, shape index: {}]
  %s22 = inlined_call_operand.vmem [shape: f32[1,128], index: 22, kind: input, shape index: {}]
  %s23 = inlined_call_operand.hbm [shape: f32[16,128], index: 23, kind: output, shape index: {}]
  %s24 = sld [smem:[#allocation0]]
  $region178: #{tpu_custom_call.1} parent=0
    _
  %s26 = ssub.s32 1, %s24
  %s27 = scalar_select 0, %s26, %s24
  $region1: #{tpu_custom_call.1} parent=0
    #allocation2 [shape = 'u8[8192]{0}', space=vmem, size = 0x2000, scoped, tag = 'input window, operand 0, single buffered']
    #allocation3 [shape = 's32[1]{0}', space=sflag, size = 0x4, scoped, tag = 'scoped memory for tpu_custom_call.1']
    #allocation4 [shape = 's32[1]{0}', space=sflag, size = 0x4, scoped, tag = 'scoped memory for tpu_custom_call.1']
    #allocation5 [shape = 'u8[32768]{0}', space=vmem, size = 0x8000, scoped, tag = 'input window, operand 1, single buffered']
    #allocation6 [shape = 's32[1]{0}', space=sflag, size = 0x4, scoped, tag = 'scoped memory for tpu_custom_call.1']
    #allocation7 [shape = 'u8[512]{0}', space=vmem, size = 0x400, scoped, tag = 'input window, operand 2, single buffered']
    #allocation8 [shape = 'u8[32768]{0}', space=vmem, size = 0x8000, scoped, tag = 'input window, operand 3, single buffered']
    #allocation9 [shape = 's32[1]{0}', space=sflag, size = 0x4, scoped, tag = 'scoped memory for tpu_custom_call.1']
    #allocation10 [shape = 'u8[512]{0}', space=vmem, size = 0x400, scoped, tag = 'input window, operand 4, single buffered']
    #allocation11 [shape = 'u8[32768]{0}', space=vmem, size = 0x8000, scoped, tag = 'input window, operand 5, single buffered']
    #allocation12 [shape = 's32[1]{0}', space=sflag, size = 0x4, scoped, tag = 'scoped memory for tpu_custom_call.1']
    #allocation13 [shape = 'u8[512]{0}', space=vmem, size = 0x400, scoped, tag = 'input window, operand 6, single buffered']
    #allocation14 [shape = 'u8[32768]{0}', space=vmem, size = 0x8000, scoped, tag = 'input window, operand 7, single buffered']
    #allocation15 [shape = 's32[1]{0}', space=sflag, size = 0x4, scoped, tag = 'scoped memory for tpu_custom_call.1']
    #allocation16 [shape = 'u8[512]{0}', space=vmem, size = 0x400, scoped, tag = 'input window, operand 8, single buffered']
    #allocation17 [shape = 'u8[32768]{0}', space=vmem, size = 0x8000, scoped, tag = 'input window, operand 9, single buffered']
    #allocation18 [shape = 's32[1]{0}', space=sflag, size = 0x4, scoped, tag = 'scoped memory for tpu_custom_call.1']
    #allocation19 [shape = 'u8[512]{0}', space=vmem, size = 0x400, scoped, tag = 'input window, operand 10, single buffered']
    #allocation20 [shape = 'u8[32768]{0}', space=vmem, size = 0x8000, scoped, tag = 'input window, operand 11, single buffered']
    #allocation21 [shape = 's32[1]{0}', space=sflag, size = 0x4, scoped, tag = 'scoped memory for tpu_custom_call.1']
    #allocation22 [shape = 'u8[512]{0}', space=vmem, size = 0x400, scoped, tag = 'input window, operand 12, single buffered']
    #allocation23 [shape = 'u8[32768]{0}', space=vmem, size = 0x8000, scoped, tag = 'input window, operand 13, single buffered']
    #allocation24 [shape = 's32[1]{0}', space=sflag, size = 0x4, scoped, tag = 'scoped memory for tpu_custom_call.1']
    #allocation25 [shape = 'u8[512]{0}', space=vmem, size = 0x400, scoped, tag = 'input window, operand 14, single buffered']
    #allocation26 [shape = 'u8[32768]{0}', space=vmem, size = 0x8000, scoped, tag = 'input window, operand 15, single buffered']
    #allocation27 [shape = 's32[1]{0}', space=sflag, size = 0x4, scoped, tag = 'scoped memory for tpu_custom_call.1']
    #allocation28 [shape = 'u8[512]{0}', space=vmem, size = 0x400, scoped, tag = 'input window, operand 16, single buffered']
    #allocation29 [shape = 'u8[32768]{0}', space=vmem, size = 0x8000, scoped, tag = 'input window, operand 19, single buffered']
    #allocation30 [shape = 's32[1]{0}', space=sflag, size = 0x4, scoped, tag = 'scoped memory for tpu_custom_call.1']
    #allocation31 [shape = 'u8[32768]{0}', space=vmem, size = 0x8000, scoped, tag = 'input window, operand 21, single buffered']
    #allocation32 [shape = 'u8[8192]{0}', space=vmem, size = 0x2000, scoped, tag = 'output window, operand 0, single buffered']
    %28 = vsyncpa [#allocation3], 0
    %29 = vsyncpa [#allocation6], 0
    %30 = vsyncpa [#allocation9], 0
    %31 = vsyncpa [#allocation12], 0
    %32 = vsyncpa [#allocation15], 0
    %33 = vsyncpa [#allocation18], 0
    %34 = vsyncpa [#allocation21], 0
    %35 = vsyncpa [#allocation24], 0
    %36 = vsyncpa [#allocation27], 0
    %37 = vsyncpa [#allocation30], 0
    %38 = vsyncpa [#allocation4], 0
    // Predicated region
    $region2: #{tpu_custom_call.1} parent=1 // pred_check
      _
    $region3: #{tpu_custom_call.1} parent=1 // pred_check_branch
      %40 = sbr.rel (0) target = $region5
    $region4: #{tpu_custom_call.1} parent=1 // pred_region
      %s42 = ssub.s32 256, 256
      %43 = vsyncadd [#allocation3], %s42
      %s44 = sshll.u32 [#allocation2], 4
      %s45 = int_to_ptr.vmem [resolvable:$true] %s44
      %50 = dma.hbm_to_vmem [thread:$0]  %s0, 256, %s45, [#allocation3], 128, 128, 8
    $region5: #{tpu_custom_call.1} parent=1 // pred_fallthru
      _
    // Predicated region
    $region6: #{tpu_custom_call.1} parent=1 // pred_check
      _
    $region7: #{tpu_custom_call.1} parent=1 // pred_check_branch
      %52 = sbr.rel (0) target = $region9
    $region8: #{tpu_custom_call.1} parent=1 // pred_region
      %s54 = ssub.s32 1024, 1024
      %55 = vsyncadd [#allocation6], %s54
      %s56 = sshll.u32 [#allocation5], 4
      %s57 = int_to_ptr.vmem [resolvable:$true] %s56
      %62 = dma.hbm_to_vmem [thread:$0]  %s1, 1024, %s57, [#allocation6], 64, 64, 4
    $region9: #{tpu_custom_call.1} parent=1 // pred_fallthru
      _
    // Predicated region
    $region10: #{tpu_custom_call.1} parent=1 // pred_check
      _
    $region11: #{tpu_custom_call.1} parent=1 // pred_check_branch
      %64 = sbr.rel (0) target = $region13
    $region12: #{tpu_custom_call.1} parent=1 // pred_region
      %s66 = ssub.s32 16, 16
      %67 = vsyncadd [#allocation6], %s66
      %s69 = sshll.u32 [#allocation7], 4
      %s70 = int_to_ptr.vmem [resolvable:$true] %s69
      %72 = dma.hbm_to_vmem [thread:$0]  %s2, 16, %s70, [#allocation6]
    $region13: #{tpu_custom_call.1} parent=1 // pred_fallthru
      _
    // Predicated region
    $region14: #{tpu_custom_call.1} parent=1 // pred_check
      _
    $region15: #{tpu_custom_call.1} parent=1 // pred_check_branch
      %74 = sbr.rel (0) target = $region17
    $region16: #{tpu_custom_call.1} parent=1 // pred_region
      %s76 = ssub.s32 1024, 1024
      %77 = vsyncadd [#allocation9], %s76
      %s78 = sshll.u32 [#allocation8], 4
      %s79 = int_to_ptr.vmem [resolvable:$true] %s78
      %84 = dma.hbm_to_vmem [thread:$0]  %s3, 1024, %s79, [#allocation9], 64, 64, 4
    $region17: #{tpu_custom_call.1} parent=1 // pred_fallthru
      _
    // Predicated region
    $region18: #{tpu_custom_call.1} parent=1 // pred_check
      _
    $region19: #{tpu_custom_call.1} parent=1 // pred_check_branch
      %86 = sbr.rel (0) target = $region21
    $region20: #{tpu_custom_call.1} parent=1 // pred_region
      %s88 = ssub.s32 16, 16
      %89 = vsyncadd [#allocation9], %s88
      %s91 = sshll.u32 [#allocation10], 4
      %s92 = int_to_ptr.vmem [resolvable:$true] %s91
      %94 = dma.hbm_to_vmem [thread:$0]  %s4, 16, %s92, [#allocation9]
    $region21: #{tpu_custom_call.1} parent=1 // pred_fallthru
      _
    // Predicated region
    $region22: #{tpu_custom_call.1} parent=1 // pred_check
      _
    $region23: #{tpu_custom_call.1} parent=1 // pred_check_branch
      %96 = sbr.rel (0) target = $region25
    $region24: #{tpu_custom_call.1} parent=1 // pred_region
      %s98 = ssub.s32 1024, 1024
      %99 = vsyncadd [#allocation12], %s98
      %s100 = sshll.u32 [#allocation11], 4
      %s101 = int_to_ptr.vmem [resolvable:$true] %s100
      %106 = dma.hbm_to_vmem [thread:$0]  %s5, 1024, %s101, [#allocation12], 64, 64, 4
    $region25: #{tpu_custom_call.1} parent=1 // pred_fallthru
      _
    // Predicated region
    $region26: #{tpu_custom_call.1} parent=1 // pred_check
      _
    $region27: #{tpu_custom_call.1} parent=1 // pred_check_branch
      %108 = sbr.rel (0) target = $region29
    $region28: #{tpu_custom_call.1} parent=1 // pred_region
      %s110 = ssub.s32 16, 16
      %111 = vsyncadd [#allocation12], %s110
      %s113 = sshll.u32 [#allocation13], 4
      %s114 = int_to_ptr.vmem [resolvable:$true] %s113
      %116 = dma.hbm_to_vmem [thread:$0]  %s6, 16, %s114, [#allocation12]
    $region29: #{tpu_custom_call.1} parent=1 // pred_fallthru
      _
    // Predicated region
    $region30: #{tpu_custom_call.1} parent=1 // pred_check
      _
    $region31: #{tpu_custom_call.1} parent=1 // pred_check_branch
      %118 = sbr.rel (0) target = $region33
    $region32: #{tpu_custom_call.1} parent=1 // pred_region
      %s120 = ssub.s32 1024, 1024
      %121 = vsyncadd [#allocation15], %s120
      %s122 = sshll.u32 [#allocation14], 4
      %s123 = int_to_ptr.vmem [resolvable:$true] %s122
      %128 = dma.hbm_to_vmem [thread:$0]  %s7, 1024, %s123, [#allocation15], 64, 64, 4
    $region33: #{tpu_custom_call.1} parent=1 // pred_fallthru
      _
    // Predicated region
    $region34: #{tpu_custom_call.1} parent=1 // pred_check
      _
    $region35: #{tpu_custom_call.1} parent=1 // pred_check_branch
      %130 = sbr.rel (0) target = $region37
    $region36: #{tpu_custom_call.1} parent=1 // pred_region
      %s132 = ssub.s32 16, 16
      %133 = vsyncadd [#allocation15], %s132
      %s135 = sshll.u32 [#allocation16], 4
      %s136 = int_to_ptr.vmem [resolvable:$true] %s135
      %138 = dma.hbm_to_vmem [thread:$0]  %s8, 16, %s136, [#allocation15]
    $region37: #{tpu_custom_call.1} parent=1 // pred_fallthru
      _
    // Predicated region
    $region38: #{tpu_custom_call.1} parent=1 // pred_check
      _
    $region39: #{tpu_custom_call.1} parent=1 // pred_check_branch
      %140 = sbr.rel (0) target = $region41
    $region40: #{tpu_custom_call.1} parent=1 // pred_region
      %s142 = ssub.s32 1024, 1024
      %143 = vsyncadd [#allocation18], %s142
      %s144 = sshll.u32 [#allocation17], 4
      %s145 = int_to_ptr.vmem [resolvable:$true] %s144
      %150 = dma.hbm_to_vmem [thread:$0]  %s9, 1024, %s145, [#allocation18], 64, 64, 4
    $region41: #{tpu_custom_call.1} parent=1 // pred_fallthru
      _
    // Predicated region
    $region42: #{tpu_custom_call.1} parent=1 // pred_check
      _
    $region43: #{tpu_custom_call.1} parent=1 // pred_check_branch
      %152 = sbr.rel (0) target = $region45
    $region44: #{tpu_custom_call.1} parent=1 // pred_region
      %s154 = ssub.s32 16, 16
      %155 = vsyncadd [#allocation18], %s154
      %s157 = sshll.u32 [#allocation19], 4
      %s158 = int_to_ptr.vmem [resolvable:$true] %s157
      %160 = dma.hbm_to_vmem [thread:$0]  %s10, 16, %s158, [#allocation18]
    $region45: #{tpu_custom_call.1} parent=1 // pred_fallthru
      _
    // Predicated region
    $region46: #{tpu_custom_call.1} parent=1 // pred_check
      _
    $region47: #{tpu_custom_call.1} parent=1 // pred_check_branch
      %162 = sbr.rel (0) target = $region49
    $region48: #{tpu_custom_call.1} parent=1 // pred_region
      %s164 = ssub.s32 1024, 1024
      %165 = vsyncadd [#allocation21], %s164
      %s166 = sshll.u32 [#allocation20], 4
      %s167 = int_to_ptr.vmem [resolvable:$true] %s166
      %172 = dma.hbm_to_vmem [thread:$0]  %s11, 1024, %s167, [#allocation21], 64, 64, 4
    $region49: #{tpu_custom_call.1} parent=1 // pred_fallthru
      _
    // Predicated region
    $region50: #{tpu_custom_call.1} parent=1 // pred_check
      _
    $region51: #{tpu_custom_call.1} parent=1 // pred_check_branch
      %174 = sbr.rel (0) target = $region53
    $region52: #{tpu_custom_call.1} parent=1 // pred_region
      %s176 = ssub.s32 16, 16
      %177 = vsyncadd [#allocation21], %s176
      %s179 = sshll.u32 [#allocation22], 4
      %s180 = int_to_ptr.vmem [resolvable:$true] %s179
      %182 = dma.hbm_to_vmem [thread:$0]  %s12, 16, %s180, [#allocation21]
    $region53: #{tpu_custom_call.1} parent=1 // pred_fallthru
      _
    // Predicated region
    $region54: #{tpu_custom_call.1} parent=1 // pred_check
      _
    $region55: #{tpu_custom_call.1} parent=1 // pred_check_branch
      %184 = sbr.rel (0) target = $region57
    $region56: #{tpu_custom_call.1} parent=1 // pred_region
      %s186 = ssub.s32 1024, 1024
      %187 = vsyncadd [#allocation24], %s186
      %s188 = sshll.u32 [#allocation23], 4
      %s189 = int_to_ptr.vmem [resolvable:$true] %s188
      %194 = dma.hbm_to_vmem [thread:$0]  %s13, 1024, %s189, [#allocation24], 64, 64, 4
    $region57: #{tpu_custom_call.1} parent=1 // pred_fallthru
      _
    // Predicated region
    $region58: #{tpu_custom_call.1} parent=1 // pred_check
      _
    $region59: #{tpu_custom_call.1} parent=1 // pred_check_branch
      %196 = sbr.rel (0) target = $region61
    $region60: #{tpu_custom_call.1} parent=1 // pred_region
      %s198 = ssub.s32 16, 16
      %199 = vsyncadd [#allocation24], %s198
      %s201 = sshll.u32 [#allocation25], 4
      %s202 = int_to_ptr.vmem [resolvable:$true] %s201
      %204 = dma.hbm_to_vmem [thread:$0]  %s14, 16, %s202, [#allocation24]
    $region61: #{tpu_custom_call.1} parent=1 // pred_fallthru
      _
    // Predicated region
    $region62: #{tpu_custom_call.1} parent=1 // pred_check
      _
    $region63: #{tpu_custom_call.1} parent=1 // pred_check_branch
      %206 = sbr.rel (0) target = $region65
    $region64: #{tpu_custom_call.1} parent=1 // pred_region
      %s208 = ssub.s32 1024, 1024
      %209 = vsyncadd [#allocation27], %s208
      %s210 = sshll.u32 [#allocation26], 4
      %s211 = int_to_ptr.vmem [resolvable:$true] %s210
      %216 = dma.hbm_to_vmem [thread:$0]  %s15, 1024, %s211, [#allocation27], 64, 64, 4
    $region65: #{tpu_custom_call.1} parent=1 // pred_fallthru
      _
    // Predicated region
    $region66: #{tpu_custom_call.1} parent=1 // pred_check
      _
    $region67: #{tpu_custom_call.1} parent=1 // pred_check_branch
      %218 = sbr.rel (0) target = $region69
    $region68: #{tpu_custom_call.1} parent=1 // pred_region
      %s220 = ssub.s32 16, 16
      %221 = vsyncadd [#allocation27], %s220
      %s223 = sshll.u32 [#allocation28], 4
      %s224 = int_to_ptr.vmem [resolvable:$true] %s223
      %226 = dma.hbm_to_vmem [thread:$0]  %s16, 16, %s224, [#allocation27]
    $region69: #{tpu_custom_call.1} parent=1 // pred_fallthru
      _
    // Predicated region
    $region70: #{tpu_custom_call.1} parent=1 // pred_check
      _
    $region71: #{tpu_custom_call.1} parent=1 // pred_check_branch
      %228 = sbr.rel (0) target = $region73
    $region72: #{tpu_custom_call.1} parent=1 // pred_region
      _
    $region73: #{tpu_custom_call.1} parent=1 // pred_fallthru
      _
    // Predicated region
    $region74: #{tpu_custom_call.1} parent=1 // pred_check
      _
    $region75: #{tpu_custom_call.1} parent=1 // pred_check_branch
      %230 = sbr.rel (0) target = $region77
    $region76: #{tpu_custom_call.1} parent=1 // pred_region
      _
    $region77: #{tpu_custom_call.1} parent=1 // pred_fallthru
      _
    // Predicated region
    $region78: #{tpu_custom_call.1} parent=1 // pred_check
      _
    $region79: #{tpu_custom_call.1} parent=1 // pred_check_branch
      %232 = sbr.rel (0) target = $region81
    $region80: #{tpu_custom_call.1} parent=1 // pred_region
      %s234 = ssub.s32 1024, 1024
      %235 = vsyncadd [#allocation30], %s234
      %s236 = sshll.u32 [#allocation29], 4
      %s237 = int_to_ptr.vmem [resolvable:$true] %s236
      %242 = dma.hbm_to_vmem [thread:$0]  %s19, 1024, %s237, [#allocation30], 64, 64, 4
    $region81: #{tpu_custom_call.1} parent=1 // pred_fallthru
      _
    // Predicated region
    $region82: #{tpu_custom_call.1} parent=1 // pred_check
      _
    $region83: #{tpu_custom_call.1} parent=1 // pred_check_branch
      %244 = sbr.rel (0) target = $region85
    $region84: #{tpu_custom_call.1} parent=1 // pred_region
      _
    $region85: #{tpu_custom_call.1} parent=1 // pred_fallthru
      _
    // Predicated region
    $region86: #{tpu_custom_call.1} parent=1 // pred_check
      _
    $region87: #{tpu_custom_call.1} parent=1 // pred_check_branch
      %246 = sbr.rel (0) target = $region89
    $region88: #{tpu_custom_call.1} parent=1 // pred_region
      %s248 = ssub.s32 1024, 1024
      %249 = vsyncadd [#allocation30], %s248
      %s250 = sshll.u32 [#allocation31], 4
      %s251 = int_to_ptr.vmem [resolvable:$true] %s250
      %256 = dma.hbm_to_vmem [thread:$0]  %s21, 1024, %s251, [#allocation30], 64, 64, 4
    $region89: #{tpu_custom_call.1} parent=1 // pred_fallthru
      _
    // Predicated region
    $region90: #{tpu_custom_call.1} parent=1 // pred_check
      _
    $region91: #{tpu_custom_call.1} parent=1 // pred_check_branch
      %258 = sbr.rel (0) target = $region93
    $region92: #{tpu_custom_call.1} parent=1 // pred_region
      _
    $region93: #{tpu_custom_call.1} parent=1 // pred_fallthru
      _
    // Predicated region
    $region94: #{tpu_custom_call.1} parent=1 // pred_check
      _
    $region95: #{tpu_custom_call.1} parent=1 // pred_check_branch
      %260 = sbr.rel (0) target = $region97
    $region96: #{tpu_custom_call.1} parent=1 // pred_region
      %261 = dma.done [#allocation3], 256
    $region97: #{tpu_custom_call.1} parent=1 // pred_fallthru
      _
    // Predicated region
    $region98: #{tpu_custom_call.1} parent=1 // pred_check
      _
    $region99: #{tpu_custom_call.1} parent=1 // pred_check_branch
      %263 = sbr.rel (0) target = $region101
    $region100: #{tpu_custom_call.1} parent=1 // pred_region
      %264 = dma.done [#allocation6], 1024
    $region101: #{tpu_custom_call.1} parent=1 // pred_fallthru
      _
    // Predicated region
    $region102: #{tpu_custom_call.1} parent=1 // pred_check
      _
    $region103: #{tpu_custom_call.1} parent=1 // pred_check_branch
      %266 = sbr.rel (0) target = $region105
    $region104: #{tpu_custom_call.1} parent=1 // pred_region
      %267 = dma.done [#allocation6], 16
    $region105: #{tpu_custom_call.1} parent=1 // pred_fallthru
      _
    // Predicated region
    $region106: #{tpu_custom_call.1} parent=1 // pred_check
      _
    $region107: #{tpu_custom_call.1} parent=1 // pred_check_branch
      %269 = sbr.rel (0) target = $region109
    $region108: #{tpu_custom_call.1} parent=1 // pred_region
      %270 = dma.done [#allocation9], 1024
    $region109: #{tpu_custom_call.1} parent=1 // pred_fallthru
      _
    // Predicated region
    $region110: #{tpu_custom_call.1} parent=1 // pred_check
      _
    $region111: #{tpu_custom_call.1} parent=1 // pred_check_branch
      %272 = sbr.rel (0) target = $region113
    $region112: #{tpu_custom_call.1} parent=1 // pred_region
      %273 = dma.done [#allocation9], 16
    $region113: #{tpu_custom_call.1} parent=1 // pred_fallthru
      _
    // Predicated region
    $region114: #{tpu_custom_call.1} parent=1 // pred_check
      _
    $region115: #{tpu_custom_call.1} parent=1 // pred_check_branch
      %275 = sbr.rel (0) target = $region117
    $region116: #{tpu_custom_call.1} parent=1 // pred_region
      %276 = dma.done [#allocation12], 1024
    $region117: #{tpu_custom_call.1} parent=1 // pred_fallthru
      _
    // Predicated region
    $region118: #{tpu_custom_call.1} parent=1 // pred_check
      _
    $region119: #{tpu_custom_call.1} parent=1 // pred_check_branch
      %278 = sbr.rel (0) target = $region121
    $region120: #{tpu_custom_call.1} parent=1 // pred_region
      %279 = dma.done [#allocation12], 16
    $region121: #{tpu_custom_call.1} parent=1 // pred_fallthru
      _
    // Predicated region
    $region122: #{tpu_custom_call.1} parent=1 // pred_check
      _
    $region123: #{tpu_custom_call.1} parent=1 // pred_check_branch
      %281 = sbr.rel (0) target = $region125
    $region124: #{tpu_custom_call.1} parent=1 // pred_region
      %282 = dma.done [#allocation15], 1024
    $region125: #{tpu_custom_call.1} parent=1 // pred_fallthru
      _
    // Predicated region
    $region126: #{tpu_custom_call.1} parent=1 // pred_check
      _
    $region127: #{tpu_custom_call.1} parent=1 // pred_check_branch
      %284 = sbr.rel (0) target = $region129
    $region128: #{tpu_custom_call.1} parent=1 // pred_region
      %285 = dma.done [#allocation15], 16
    $region129: #{tpu_custom_call.1} parent=1 // pred_fallthru
      _
    // Predicated region
    $region130: #{tpu_custom_call.1} parent=1 // pred_check
      _
    $region131: #{tpu_custom_call.1} parent=1 // pred_check_branch
      %287 = sbr.rel (0) target = $region133
    $region132: #{tpu_custom_call.1} parent=1 // pred_region
      %288 = dma.done [#allocation18], 1024
    $region133: #{tpu_custom_call.1} parent=1 // pred_fallthru
      _
    // Predicated region
    $region134: #{tpu_custom_call.1} parent=1 // pred_check
      _
    $region135: #{tpu_custom_call.1} parent=1 // pred_check_branch
      %290 = sbr.rel (0) target = $region137
    $region136: #{tpu_custom_call.1} parent=1 // pred_region
      %291 = dma.done [#allocation18], 16
    $region137: #{tpu_custom_call.1} parent=1 // pred_fallthru
      _
    // Predicated region
    $region138: #{tpu_custom_call.1} parent=1 // pred_check
      _
    $region139: #{tpu_custom_call.1} parent=1 // pred_check_branch
      %293 = sbr.rel (0) target = $region141
    $region140: #{tpu_custom_call.1} parent=1 // pred_region
      %294 = dma.done [#allocation21], 1024
    $region141: #{tpu_custom_call.1} parent=1 // pred_fallthru
      _
    // Predicated region
    $region142: #{tpu_custom_call.1} parent=1 // pred_check
      _
    $region143: #{tpu_custom_call.1} parent=1 // pred_check_branch
      %296 = sbr.rel (0) target = $region145
    $region144: #{tpu_custom_call.1} parent=1 // pred_region
      %297 = dma.done [#allocation21], 16
    $region145: #{tpu_custom_call.1} parent=1 // pred_fallthru
      _
    // Predicated region
    $region146: #{tpu_custom_call.1} parent=1 // pred_check
      _
    $region147: #{tpu_custom_call.1} parent=1 // pred_check_branch
      %299 = sbr.rel (0) target = $region149
    $region148: #{tpu_custom_call.1} parent=1 // pred_region
      %300 = dma.done [#allocation24], 1024
    $region149: #{tpu_custom_call.1} parent=1 // pred_fallthru
      _
    // Predicated region
    $region150: #{tpu_custom_call.1} parent=1 // pred_check
      _
    $region151: #{tpu_custom_call.1} parent=1 // pred_check_branch
      %302 = sbr.rel (0) target = $region153
    $region152: #{tpu_custom_call.1} parent=1 // pred_region
      %303 = dma.done [#allocation24], 16
    $region153: #{tpu_custom_call.1} parent=1 // pred_fallthru
      _
    // Predicated region
    $region154: #{tpu_custom_call.1} parent=1 // pred_check
      _
    $region155: #{tpu_custom_call.1} parent=1 // pred_check_branch
      %305 = sbr.rel (0) target = $region157
    $region156: #{tpu_custom_call.1} parent=1 // pred_region
      %306 = dma.done [#allocation27], 1024
    $region157: #{tpu_custom_call.1} parent=1 // pred_fallthru
      _
    // Predicated region
    $region158: #{tpu_custom_call.1} parent=1 // pred_check
      _
    $region159: #{tpu_custom_call.1} parent=1 // pred_check_branch
      %308 = sbr.rel (0) target = $region161
    $region160: #{tpu_custom_call.1} parent=1 // pred_region
      %309 = dma.done [#allocation27], 16
    $region161: #{tpu_custom_call.1} parent=1 // pred_fallthru
      _
    // Predicated region
    $region162: #{tpu_custom_call.1} parent=1 // pred_check
      _
    $region163: #{tpu_custom_call.1} parent=1 // pred_check_branch
      %311 = sbr.rel (0) target = $region165
    $region164: #{tpu_custom_call.1} parent=1 // pred_region
      %312 = dma.done [#allocation30], 1024
    $region165: #{tpu_custom_call.1} parent=1 // pred_fallthru
      _
    // Predicated region
    $region166: #{tpu_custom_call.1} parent=1 // pred_check
      _
    $region167: #{tpu_custom_call.1} parent=1 // pred_check_branch
      %314 = sbr.rel (0) target = $region169
    $region168: #{tpu_custom_call.1} parent=1 // pred_region
      %315 = dma.done [#allocation30], 1024
    $region169: #{tpu_custom_call.1} parent=1 // pred_fallthru
      _
    %v317 = vld [vmem:[#allocation2] sm:$0xff]
    %v318 = vld [vmem:[#allocation2 + $0x8] sm:$0xff]
    %v319 = vpack.c.bf16 %v318, %v317
    %v320 = vld [vmem:[#allocation5] sm:$0xf]
    %v321 = vld [vmem:[#allocation5 + $0x4] sm:$0xf]
    %v322 = vld [vmem:[#allocation5 + $0x8] sm:$0xf]
    %v323 = vld [vmem:[#allocation5 + $0xc] sm:$0xf]
    %v324 = vld [vmem:[#allocation5 + $0x10] sm:$0xf]
    %v325 = vld [vmem:[#allocation5 + $0x14] sm:$0xf]
    %v326 = vld [vmem:[#allocation5 + $0x18] sm:$0xf]
    %v327 = vld [vmem:[#allocation5 + $0x1c] sm:$0xf]
    %v328 = vld [vmem:[#allocation5 + $0x20] sm:$0xf]
    %v329 = vld [vmem:[#allocation5 + $0x24] sm:$0xf]
    %v330 = vld [vmem:[#allocation5 + $0x28] sm:$0xf]
    %v331 = vld [vmem:[#allocation5 + $0x2c] sm:$0xf]
    %v332 = vld [vmem:[#allocation5 + $0x30] sm:$0xf]
    %v333 = vld [vmem:[#allocation5 + $0x34] sm:$0xf]
    %v334 = vld [vmem:[#allocation5 + $0x38] sm:$0xf]
    %v335 = vld [vmem:[#allocation5 + $0x3c] sm:$0xf]
    %v336 = vld [vmem:[#allocation7] sm:$0x1]
    %v338 = vlaneseq
    %v339 = vshrl.u32 %v338, 7
    %v340 = vsub.s32 0, %v339
    %v341 = vrot.slane %v336, %v340
    %v359 = vunpack.c.l.b16 %v320
    %v360 = vunpack.c.l.b16 %v321
    %v361 = vunpack.c.l.b16 %v322
    %v362 = vunpack.c.l.b16 %v323
    %v363 = vunpack.c.l.b16 %v324
    %v364 = vunpack.c.l.b16 %v325
    %v365 = vunpack.c.l.b16 %v326
    %v366 = vunpack.c.l.b16 %v327
    %v367 = vunpack.c.l.b16 %v328
    %v368 = vunpack.c.l.b16 %v329
    %v369 = vunpack.c.l.b16 %v330
    %v370 = vunpack.c.l.b16 %v331
    %v371 = vunpack.c.l.b16 %v332
    %v372 = vunpack.c.l.b16 %v333
    %v373 = vunpack.c.l.b16 %v334
    %v374 = vunpack.c.l.b16 %v335
    %v375 = vpack.c.b16 %v360, %v359
    %v376 = vpack.c.b16 %v362, %v361
    %v377 = vpack.c.b16 %v364, %v363
    %v378 = vpack.c.b16 %v366, %v365
    %v379 = vpack.c.b16 %v368, %v367
    %v380 = vpack.c.b16 %v370, %v369
    %v381 = vpack.c.b16 %v372, %v371
    %v382 = vpack.c.b16 %v374, %v373
    %391 = vmatprep.subr.bf16.mxu0 0
    %392 = vmatpush1.bf16.msra.mxu0 %v375
    %393 = vmatprep.subr.bf16.mxu0 0
    %394 = vmatpush1.bf16.msra.mxu0 %v376
    %395 = vmatprep.subr.bf16.mxu0 0
    %396 = vmatpush1.bf16.msra.mxu0 %v377
    %397 = vmatprep.subr.bf16.mxu0 0
    %398 = vmatpush1.bf16.msra.mxu0 %v378
    %399 = vmatprep.subr.bf16.mxu0 0
    %400 = vmatpush1.bf16.msra.mxu0 %v379
    %401 = vmatprep.subr.bf16.mxu0 0
    %402 = vmatpush1.bf16.msra.mxu0 %v380
    %403 = vmatprep.subr.bf16.mxu0 0
    %404 = vmatpush1.bf16.msra.mxu0 %v381
    %405 = vmatprep.subr.bf16.mxu0 0
    %406 = vmatpush1.bf16.msra.mxu0 %v382
    %407 = vmatprep.subr.bf16.mxu0 0
    %408 = vmatpush1.bf16.msra.mxu0 0
    %409 = vmatprep.subr.bf16.mxu0 0
    %410 = vmatpush1.bf16.msra.mxu0 0
    %411 = vmatprep.subr.bf16.mxu0 0
    %412 = vmatpush1.bf16.msra.mxu0 0
    %413 = vmatprep.subr.bf16.mxu0 0
    %414 = vmatpush1.bf16.msra.mxu0 0
    %415 = vmatprep.subr.bf16.mxu0 0
    %416 = vmatpush1.bf16.msra.mxu0 0
    %417 = vmatprep.subr.bf16.mxu0 0
    %418 = vmatpush1.bf16.msra.mxu0 0
    %419 = vmatprep.subr.bf16.mxu0 0
    %420 = vmatpush1.bf16.msra.mxu0 0
    %421 = vmatprep.subr.bf16.mxu0 0
    %422 = vmatpush1.bf16.msra.mxu0 0
    %423 = vmatprep.mubr.bf16.mxu0 0
    %424 = vmatmul.mubr.bf16.gmra.mrb[0].mxu0 %v319
    %v425 = vpop.f32.mrb[0].mxu0
    %v426 = vadd.f32 %v341, %v425
    %v427 = vpop.f32.mrb[0].mxu0
    %v428 = vpop.f32.mrb[0].mxu0
    %v429 = vadd.f32 %v341, %v428
    %v430 = vpop.f32.mrb[0].mxu0
    %431 = vdwg.mxu0
    %v432 = vmax.f32 %v426, 0.0
    %v433 = vmax.f32 %v429, 0.0
    %v434 = vpack.c.bf16 %v433, %v432
    %v435 = vld [vmem:[#allocation8] sm:$0xf]
    %v436 = vld [vmem:[#allocation8 + $0x4] sm:$0xf]
    %v437 = vld [vmem:[#allocation8 + $0x8] sm:$0xf]
    %v438 = vld [vmem:[#allocation8 + $0xc] sm:$0xf]
    %v439 = vld [vmem:[#allocation8 + $0x10] sm:$0xf]
    %v440 = vld [vmem:[#allocation8 + $0x14] sm:$0xf]
    %v441 = vld [vmem:[#allocation8 + $0x18] sm:$0xf]
    %v442 = vld [vmem:[#allocation8 + $0x1c] sm:$0xf]
    %v443 = vld [vmem:[#allocation8 + $0x20] sm:$0xf]
    %v444 = vld [vmem:[#allocation8 + $0x24] sm:$0xf]
    %v445 = vld [vmem:[#allocation8 + $0x28] sm:$0xf]
    %v446 = vld [vmem:[#allocation8 + $0x2c] sm:$0xf]
    %v447 = vld [vmem:[#allocation8 + $0x30] sm:$0xf]
    %v448 = vld [vmem:[#allocation8 + $0x34] sm:$0xf]
    %v449 = vld [vmem:[#allocation8 + $0x38] sm:$0xf]
    %v450 = vld [vmem:[#allocation8 + $0x3c] sm:$0xf]
    %v451 = vld [vmem:[#allocation10] sm:$0x1]
    %v453 = vlaneseq
    %v454 = vshrl.u32 %v453, 7
    %v455 = vsub.s32 0, %v454
    %v456 = vrot.slane %v451, %v455
    %v474 = vunpack.c.l.b16 %v435
    %v475 = vunpack.c.l.b16 %v436
    %v476 = vunpack.c.l.b16 %v437
    %v477 = vunpack.c.l.b16 %v438
    %v478 = vunpack.c.l.b16 %v439
    %v479 = vunpack.c.l.b16 %v440
    %v480 = vunpack.c.l.b16 %v441
    %v481 = vunpack.c.l.b16 %v442
    %v482 = vunpack.c.l.b16 %v443
    %v483 = vunpack.c.l.b16 %v444
    %v484 = vunpack.c.l.b16 %v445
    %v485 = vunpack.c.l.b16 %v446
    %v486 = vunpack.c.l.b16 %v447
    %v487 = vunpack.c.l.b16 %v448
    %v488 = vunpack.c.l.b16 %v449
    %v489 = vunpack.c.l.b16 %v450
    %v490 = vpack.c.b16 %v475, %v474
    %v491 = vpack.c.b16 %v477, %v476
    %v492 = vpack.c.b16 %v479, %v478
    %v493 = vpack.c.b16 %v481, %v480
    %v494 = vpack.c.b16 %v483, %v482
    %v495 = vpack.c.b16 %v485, %v484
    %v496 = vpack.c.b16 %v487, %v486
    %v497 = vpack.c.b16 %v489, %v488
    %506 = vmatprep.subr.bf16.mxu0 0
    %507 = vmatpush1.bf16.msra.mxu0 %v490
    %508 = vmatprep.subr.bf16.mxu0 0
    %509 = vmatpush1.bf16.msra.mxu0 %v491
    %510 = vmatprep.subr.bf16.mxu0 0
    %511 = vmatpush1.bf16.msra.mxu0 %v492
    %512 = vmatprep.subr.bf16.mxu0 0
    %513 = vmatpush1.bf16.msra.mxu0 %v493
    %514 = vmatprep.subr.bf16.mxu0 0
    %515 = vmatpush1.bf16.msra.mxu0 %v494
    %516 = vmatprep.subr.bf16.mxu0 0
    %517 = vmatpush1.bf16.msra.mxu0 %v495
    %518 = vmatprep.subr.bf16.mxu0 0
    %519 = vmatpush1.bf16.msra.mxu0 %v496
    %520 = vmatprep.subr.bf16.mxu0 0
    %521 = vmatpush1.bf16.msra.mxu0 %v497
    %522 = vmatprep.subr.bf16.mxu0 0
    %523 = vmatpush1.bf16.msra.mxu0 0
    %524 = vmatprep.subr.bf16.mxu0 0
    %525 = vmatpush1.bf16.msra.mxu0 0
    %526 = vmatprep.subr.bf16.mxu0 0
    %527 = vmatpush1.bf16.msra.mxu0 0
    %528 = vmatprep.subr.bf16.mxu0 0
    %529 = vmatpush1.bf16.msra.mxu0 0
    %530 = vmatprep.subr.bf16.mxu0 0
    %531 = vmatpush1.bf16.msra.mxu0 0
    %532 = vmatprep.subr.bf16.mxu0 0
    %533 = vmatpush1.bf16.msra.mxu0 0
    %534 = vmatprep.subr.bf16.mxu0 0
    %535 = vmatpush1.bf16.msra.mxu0 0
    %536 = vmatprep.subr.bf16.mxu0 0
    %537 = vmatpush1.bf16.msra.mxu0 0
    %538 = vmatprep.mubr.bf16.mxu0 0
    %539 = vmatmul.mubr.bf16.gmra.mrb[0].mxu0 %v434
    %v540 = vpop.f32.mrb[0].mxu0
    %v541 = vadd.f32 %v456, %v540
    %v542 = vpop.f32.mrb[0].mxu0
    %v543 = vpop.f32.mrb[0].mxu0
    %v544 = vadd.f32 %v456, %v543
    %v545 = vpop.f32.mrb[0].mxu0
    %546 = vdwg.mxu0
    %v547 = vmax.f32 %v541, 0.0
    %v548 = vmax.f32 %v544, 0.0
    %v549 = vpack.c.bf16 %v548, %v547
    %v550 = vld [vmem:[#allocation11] sm:$0xf]
    %v551 = vld [vmem:[#allocation11 + $0x4] sm:$0xf]
    %v552 = vld [vmem:[#allocation11 + $0x8] sm:$0xf]
    %v553 = vld [vmem:[#allocation11 + $0xc] sm:$0xf]
    %v554 = vld [vmem:[#allocation11 + $0x10] sm:$0xf]
    %v555 = vld [vmem:[#allocation11 + $0x14] sm:$0xf]
    %v556 = vld [vmem:[#allocation11 + $0x18] sm:$0xf]
    %v557 = vld [vmem:[#allocation11 + $0x1c] sm:$0xf]
    %v558 = vld [vmem:[#allocation11 + $0x20] sm:$0xf]
    %v559 = vld [vmem:[#allocation11 + $0x24] sm:$0xf]
    %v560 = vld [vmem:[#allocation11 + $0x28] sm:$0xf]
    %v561 = vld [vmem:[#allocation11 + $0x2c] sm:$0xf]
    %v562 = vld [vmem:[#allocation11 + $0x30] sm:$0xf]
    %v563 = vld [vmem:[#allocation11 + $0x34] sm:$0xf]
    %v564 = vld [vmem:[#allocation11 + $0x38] sm:$0xf]
    %v565 = vld [vmem:[#allocation11 + $0x3c] sm:$0xf]
    %v566 = vld [vmem:[#allocation13] sm:$0x1]
    %v568 = vlaneseq
    %v569 = vshrl.u32 %v568, 7
    %v570 = vsub.s32 0, %v569
    %v571 = vrot.slane %v566, %v570
    %v589 = vunpack.c.l.b16 %v550
    %v590 = vunpack.c.l.b16 %v551
    %v591 = vunpack.c.l.b16 %v552
    %v592 = vunpack.c.l.b16 %v553
    %v593 = vunpack.c.l.b16 %v554
    %v594 = vunpack.c.l.b16 %v555
    %v595 = vunpack.c.l.b16 %v556
    %v596 = vunpack.c.l.b16 %v557
    %v597 = vunpack.c.l.b16 %v558
    %v598 = vunpack.c.l.b16 %v559
    %v599 = vunpack.c.l.b16 %v560
    %v600 = vunpack.c.l.b16 %v561
    %v601 = vunpack.c.l.b16 %v562
    %v602 = vunpack.c.l.b16 %v563
    %v603 = vunpack.c.l.b16 %v564
    %v604 = vunpack.c.l.b16 %v565
    %v605 = vpack.c.b16 %v590, %v589
    %v606 = vpack.c.b16 %v592, %v591
    %v607 = vpack.c.b16 %v594, %v593
    %v608 = vpack.c.b16 %v596, %v595
    %v609 = vpack.c.b16 %v598, %v597
    %v610 = vpack.c.b16 %v600, %v599
    %v611 = vpack.c.b16 %v602, %v601
    %v612 = vpack.c.b16 %v604, %v603
    %621 = vmatprep.subr.bf16.mxu0 0
    %622 = vmatpush1.bf16.msra.mxu0 %v605
    %623 = vmatprep.subr.bf16.mxu0 0
    %624 = vmatpush1.bf16.msra.mxu0 %v606
    %625 = vmatprep.subr.bf16.mxu0 0
    %626 = vmatpush1.bf16.msra.mxu0 %v607
    %627 = vmatprep.subr.bf16.mxu0 0
    %628 = vmatpush1.bf16.msra.mxu0 %v608
    %629 = vmatprep.subr.bf16.mxu0 0
    %630 = vmatpush1.bf16.msra.mxu0 %v609
    %631 = vmatprep.subr.bf16.mxu0 0
    %632 = vmatpush1.bf16.msra.mxu0 %v610
    %633 = vmatprep.subr.bf16.mxu0 0
    %634 = vmatpush1.bf16.msra.mxu0 %v611
    %635 = vmatprep.subr.bf16.mxu0 0
    %636 = vmatpush1.bf16.msra.mxu0 %v612
    %637 = vmatprep.subr.bf16.mxu0 0
    %638 = vmatpush1.bf16.msra.mxu0 0
    %639 = vmatprep.subr.bf16.mxu0 0
    %640 = vmatpush1.bf16.msra.mxu0 0
    %641 = vmatprep.subr.bf16.mxu0 0
    %642 = vmatpush1.bf16.msra.mxu0 0
    %643 = vmatprep.subr.bf16.mxu0 0
    %644 = vmatpush1.bf16.msra.mxu0 0
    %645 = vmatprep.subr.bf16.mxu0 0
    %646 = vmatpush1.bf16.msra.mxu0 0
    %647 = vmatprep.subr.bf16.mxu0 0
    %648 = vmatpush1.bf16.msra.mxu0 0
    %649 = vmatprep.subr.bf16.mxu0 0
    %650 = vmatpush1.bf16.msra.mxu0 0
    %651 = vmatprep.subr.bf16.mxu0 0
    %652 = vmatpush1.bf16.msra.mxu0 0
    %653 = vmatprep.mubr.bf16.mxu0 0
    %654 = vmatmul.mubr.bf16.gmra.mrb[0].mxu0 %v549
    %v655 = vpop.f32.mrb[0].mxu0
    %v656 = vadd.f32 %v571, %v655
    %v657 = vpop.f32.mrb[0].mxu0
    %v658 = vpop.f32.mrb[0].mxu0
    %v659 = vadd.f32 %v571, %v658
    %v660 = vpop.f32.mrb[0].mxu0
    %661 = vdwg.mxu0
    %v662 = vmax.f32 %v656, 0.0
    %v663 = vmax.f32 %v659, 0.0
    %v664 = vpack.c.bf16 %v663, %v662
    %v665 = vld [vmem:[#allocation14] sm:$0xf]
    %v666 = vld [vmem:[#allocation14 + $0x4] sm:$0xf]
    %v667 = vld [vmem:[#allocation14 + $0x8] sm:$0xf]
    %v668 = vld [vmem:[#allocation14 + $0xc] sm:$0xf]
    %v669 = vld [vmem:[#allocation14 + $0x10] sm:$0xf]
    %v670 = vld [vmem:[#allocation14 + $0x14] sm:$0xf]
    %v671 = vld [vmem:[#allocation14 + $0x18] sm:$0xf]
    %v672 = vld [vmem:[#allocation14 + $0x1c] sm:$0xf]
    %v673 = vld [vmem:[#allocation14 + $0x20] sm:$0xf]
    %v674 = vld [vmem:[#allocation14 + $0x24] sm:$0xf]
    %v675 = vld [vmem:[#allocation14 + $0x28] sm:$0xf]
    %v676 = vld [vmem:[#allocation14 + $0x2c] sm:$0xf]
    %v677 = vld [vmem:[#allocation14 + $0x30] sm:$0xf]
    %v678 = vld [vmem:[#allocation14 + $0x34] sm:$0xf]
    %v679 = vld [vmem:[#allocation14 + $0x38] sm:$0xf]
    %v680 = vld [vmem:[#allocation14 + $0x3c] sm:$0xf]
    %v681 = vld [vmem:[#allocation16] sm:$0x1]
    %v683 = vlaneseq
    %v684 = vshrl.u32 %v683, 7
    %v685 = vsub.s32 0, %v684
    %v686 = vrot.slane %v681, %v685
    %v704 = vunpack.c.l.b16 %v665
    %v705 = vunpack.c.l.b16 %v666
    %v706 = vunpack.c.l.b16 %v667
    %v707 = vunpack.c.l.b16 %v668
    %v708 = vunpack.c.l.b16 %v669
    %v709 = vunpack.c.l.b16 %v670
    %v710 = vunpack.c.l.b16 %v671
    %v711 = vunpack.c.l.b16 %v672
    %v712 = vunpack.c.l.b16 %v673
    %v713 = vunpack.c.l.b16 %v674
    %v714 = vunpack.c.l.b16 %v675
    %v715 = vunpack.c.l.b16 %v676
    %v716 = vunpack.c.l.b16 %v677
    %v717 = vunpack.c.l.b16 %v678
    %v718 = vunpack.c.l.b16 %v679
    %v719 = vunpack.c.l.b16 %v680
    %v720 = vpack.c.b16 %v705, %v704
    %v721 = vpack.c.b16 %v707, %v706
    %v722 = vpack.c.b16 %v709, %v708
    %v723 = vpack.c.b16 %v711, %v710
    %v724 = vpack.c.b16 %v713, %v712
    %v725 = vpack.c.b16 %v715, %v714
    %v726 = vpack.c.b16 %v717, %v716
    %v727 = vpack.c.b16 %v719, %v718
    %736 = vmatprep.subr.bf16.mxu0 0
    %737 = vmatpush1.bf16.msra.mxu0 %v720
    %738 = vmatprep.subr.bf16.mxu0 0
    %739 = vmatpush1.bf16.msra.mxu0 %v721
    %740 = vmatprep.subr.bf16.mxu0 0
    %741 = vmatpush1.bf16.msra.mxu0 %v722
    %742 = vmatprep.subr.bf16.mxu0 0
    %743 = vmatpush1.bf16.msra.mxu0 %v723
    %744 = vmatprep.subr.bf16.mxu0 0
    %745 = vmatpush1.bf16.msra.mxu0 %v724
    %746 = vmatprep.subr.bf16.mxu0 0
    %747 = vmatpush1.bf16.msra.mxu0 %v725
    %748 = vmatprep.subr.bf16.mxu0 0
    %749 = vmatpush1.bf16.msra.mxu0 %v726
    %750 = vmatprep.subr.bf16.mxu0 0
    %751 = vmatpush1.bf16.msra.mxu0 %v727
    %752 = vmatprep.subr.bf16.mxu0 0
    %753 = vmatpush1.bf16.msra.mxu0 0
    %754 = vmatprep.subr.bf16.mxu0 0
    %755 = vmatpush1.bf16.msra.mxu0 0
    %756 = vmatprep.subr.bf16.mxu0 0
    %757 = vmatpush1.bf16.msra.mxu0 0
    %758 = vmatprep.subr.bf16.mxu0 0
    %759 = vmatpush1.bf16.msra.mxu0 0
    %760 = vmatprep.subr.bf16.mxu0 0
    %761 = vmatpush1.bf16.msra.mxu0 0
    %762 = vmatprep.subr.bf16.mxu0 0
    %763 = vmatpush1.bf16.msra.mxu0 0
    %764 = vmatprep.subr.bf16.mxu0 0
    %765 = vmatpush1.bf16.msra.mxu0 0
    %766 = vmatprep.subr.bf16.mxu0 0
    %767 = vmatpush1.bf16.msra.mxu0 0
    %768 = vmatprep.mubr.bf16.mxu0 0
    %769 = vmatmul.mubr.bf16.gmra.mrb[0].mxu0 %v664
    %v770 = vpop.f32.mrb[0].mxu0
    %v771 = vadd.f32 %v686, %v770
    %v772 = vpop.f32.mrb[0].mxu0
    %v773 = vpop.f32.mrb[0].mxu0
    %v774 = vadd.f32 %v686, %v773
    %v775 = vpop.f32.mrb[0].mxu0
    %776 = vdwg.mxu0
    %v777 = vmax.f32 %v771, 0.0
    %v778 = vmax.f32 %v774, 0.0
    %v779 = vpack.c.bf16 %v778, %v777
    %v780 = vld [vmem:[#allocation17] sm:$0xf]
    %v781 = vld [vmem:[#allocation17 + $0x4] sm:$0xf]
    %v782 = vld [vmem:[#allocation17 + $0x8] sm:$0xf]
    %v783 = vld [vmem:[#allocation17 + $0xc] sm:$0xf]
    %v784 = vld [vmem:[#allocation17 + $0x10] sm:$0xf]
    %v785 = vld [vmem:[#allocation17 + $0x14] sm:$0xf]
    %v786 = vld [vmem:[#allocation17 + $0x18] sm:$0xf]
    %v787 = vld [vmem:[#allocation17 + $0x1c] sm:$0xf]
    %v788 = vld [vmem:[#allocation17 + $0x20] sm:$0xf]
    %v789 = vld [vmem:[#allocation17 + $0x24] sm:$0xf]
    %v790 = vld [vmem:[#allocation17 + $0x28] sm:$0xf]
    %v791 = vld [vmem:[#allocation17 + $0x2c] sm:$0xf]
    %v792 = vld [vmem:[#allocation17 + $0x30] sm:$0xf]
    %v793 = vld [vmem:[#allocation17 + $0x34] sm:$0xf]
    %v794 = vld [vmem:[#allocation17 + $0x38] sm:$0xf]
    %v795 = vld [vmem:[#allocation17 + $0x3c] sm:$0xf]
    %v796 = vld [vmem:[#allocation19] sm:$0x1]
    %v798 = vlaneseq
    %v799 = vshrl.u32 %v798, 7
    %v800 = vsub.s32 0, %v799
    %v801 = vrot.slane %v796, %v800
    %v819 = vunpack.c.l.b16 %v780
    %v820 = vunpack.c.l.b16 %v781
    %v821 = vunpack.c.l.b16 %v782
    %v822 = vunpack.c.l.b16 %v783
    %v823 = vunpack.c.l.b16 %v784
    %v824 = vunpack.c.l.b16 %v785
    %v825 = vunpack.c.l.b16 %v786
    %v826 = vunpack.c.l.b16 %v787
    %v827 = vunpack.c.l.b16 %v788
    %v828 = vunpack.c.l.b16 %v789
    %v829 = vunpack.c.l.b16 %v790
    %v830 = vunpack.c.l.b16 %v791
    %v831 = vunpack.c.l.b16 %v792
    %v832 = vunpack.c.l.b16 %v793
    %v833 = vunpack.c.l.b16 %v794
    %v834 = vunpack.c.l.b16 %v795
    %v835 = vpack.c.b16 %v820, %v819
    %v836 = vpack.c.b16 %v822, %v821
    %v837 = vpack.c.b16 %v824, %v823
    %v838 = vpack.c.b16 %v826, %v825
    %v839 = vpack.c.b16 %v828, %v827
    %v840 = vpack.c.b16 %v830, %v829
    %v841 = vpack.c.b16 %v832, %v831
    %v842 = vpack.c.b16 %v834, %v833
    %851 = vmatprep.subr.bf16.mxu0 0
    %852 = vmatpush1.bf16.msra.mxu0 %v835
    %853 = vmatprep.subr.bf16.mxu0 0
    %854 = vmatpush1.bf16.msra.mxu0 %v836
    %855 = vmatprep.subr.bf16.mxu0 0
    %856 = vmatpush1.bf16.msra.mxu0 %v837
    %857 = vmatprep.subr.bf16.mxu0 0
    %858 = vmatpush1.bf16.msra.mxu0 %v838
    %859 = vmatprep.subr.bf16.mxu0 0
    %860 = vmatpush1.bf16.msra.mxu0 %v839
    %861 = vmatprep.subr.bf16.mxu0 0
    %862 = vmatpush1.bf16.msra.mxu0 %v840
    %863 = vmatprep.subr.bf16.mxu0 0
    %864 = vmatpush1.bf16.msra.mxu0 %v841
    %865 = vmatprep.subr.bf16.mxu0 0
    %866 = vmatpush1.bf16.msra.mxu0 %v842
    %867 = vmatprep.subr.bf16.mxu0 0
    %868 = vmatpush1.bf16.msra.mxu0 0
    %869 = vmatprep.subr.bf16.mxu0 0
    %870 = vmatpush1.bf16.msra.mxu0 0
    %871 = vmatprep.subr.bf16.mxu0 0
    %872 = vmatpush1.bf16.msra.mxu0 0
    %873 = vmatprep.subr.bf16.mxu0 0
    %874 = vmatpush1.bf16.msra.mxu0 0
    %875 = vmatprep.subr.bf16.mxu0 0
    %876 = vmatpush1.bf16.msra.mxu0 0
    %877 = vmatprep.subr.bf16.mxu0 0
    %878 = vmatpush1.bf16.msra.mxu0 0
    %879 = vmatprep.subr.bf16.mxu0 0
    %880 = vmatpush1.bf16.msra.mxu0 0
    %881 = vmatprep.subr.bf16.mxu0 0
    %882 = vmatpush1.bf16.msra.mxu0 0
    %883 = vmatprep.mubr.bf16.mxu0 0
    %884 = vmatmul.mubr.bf16.gmra.mrb[0].mxu0 %v779
    %v885 = vpop.f32.mrb[0].mxu0
    %v886 = vadd.f32 %v801, %v885
    %v887 = vpop.f32.mrb[0].mxu0
    %v888 = vpop.f32.mrb[0].mxu0
    %v889 = vadd.f32 %v801, %v888
    %v890 = vpop.f32.mrb[0].mxu0
    %891 = vdwg.mxu0
    %v892 = vmax.f32 %v886, 0.0
    %v893 = vmax.f32 %v889, 0.0
    %v894 = vpack.c.bf16 %v893, %v892
    %v895 = vld [vmem:[#allocation20] sm:$0xf]
    %v896 = vld [vmem:[#allocation20 + $0x4] sm:$0xf]
    %v897 = vld [vmem:[#allocation20 + $0x8] sm:$0xf]
    %v898 = vld [vmem:[#allocation20 + $0xc] sm:$0xf]
    %v899 = vld [vmem:[#allocation20 + $0x10] sm:$0xf]
    %v900 = vld [vmem:[#allocation20 + $0x14] sm:$0xf]
    %v901 = vld [vmem:[#allocation20 + $0x18] sm:$0xf]
    %v902 = vld [vmem:[#allocation20 + $0x1c] sm:$0xf]
    %v903 = vld [vmem:[#allocation20 + $0x20] sm:$0xf]
    %v904 = vld [vmem:[#allocation20 + $0x24] sm:$0xf]
    %v905 = vld [vmem:[#allocation20 + $0x28] sm:$0xf]
    %v906 = vld [vmem:[#allocation20 + $0x2c] sm:$0xf]
    %v907 = vld [vmem:[#allocation20 + $0x30] sm:$0xf]
    %v908 = vld [vmem:[#allocation20 + $0x34] sm:$0xf]
    %v909 = vld [vmem:[#allocation20 + $0x38] sm:$0xf]
    %v910 = vld [vmem:[#allocation20 + $0x3c] sm:$0xf]
    %v911 = vld [vmem:[#allocation22] sm:$0x1]
    %v913 = vlaneseq
    %v914 = vshrl.u32 %v913, 7
    %v915 = vsub.s32 0, %v914
    %v916 = vrot.slane %v911, %v915
    %v934 = vunpack.c.l.b16 %v895
    %v935 = vunpack.c.l.b16 %v896
    %v936 = vunpack.c.l.b16 %v897
    %v937 = vunpack.c.l.b16 %v898
    %v938 = vunpack.c.l.b16 %v899
    %v939 = vunpack.c.l.b16 %v900
    %v940 = vunpack.c.l.b16 %v901
    %v941 = vunpack.c.l.b16 %v902
    %v942 = vunpack.c.l.b16 %v903
    %v943 = vunpack.c.l.b16 %v904
    %v944 = vunpack.c.l.b16 %v905
    %v945 = vunpack.c.l.b16 %v906
    %v946 = vunpack.c.l.b16 %v907
    %v947 = vunpack.c.l.b16 %v908
    %v948 = vunpack.c.l.b16 %v909
    %v949 = vunpack.c.l.b16 %v910
    %v950 = vpack.c.b16 %v935, %v934
    %v951 = vpack.c.b16 %v937, %v936
    %v952 = vpack.c.b16 %v939, %v938
    %v953 = vpack.c.b16 %v941, %v940
    %v954 = vpack.c.b16 %v943, %v942
    %v955 = vpack.c.b16 %v945, %v944
    %v956 = vpack.c.b16 %v947, %v946
    %v957 = vpack.c.b16 %v949, %v948
    %966 = vmatprep.subr.bf16.mxu0 0
    %967 = vmatpush1.bf16.msra.mxu0 %v950
    %968 = vmatprep.subr.bf16.mxu0 0
    %969 = vmatpush1.bf16.msra.mxu0 %v951
    %970 = vmatprep.subr.bf16.mxu0 0
    %971 = vmatpush1.bf16.msra.mxu0 %v952
    %972 = vmatprep.subr.bf16.mxu0 0
    %973 = vmatpush1.bf16.msra.mxu0 %v953
    %974 = vmatprep.subr.bf16.mxu0 0
    %975 = vmatpush1.bf16.msra.mxu0 %v954
    %976 = vmatprep.subr.bf16.mxu0 0
    %977 = vmatpush1.bf16.msra.mxu0 %v955
    %978 = vmatprep.subr.bf16.mxu0 0
    %979 = vmatpush1.bf16.msra.mxu0 %v956
    %980 = vmatprep.subr.bf16.mxu0 0
    %981 = vmatpush1.bf16.msra.mxu0 %v957
    %982 = vmatprep.subr.bf16.mxu0 0
    %983 = vmatpush1.bf16.msra.mxu0 0
    %984 = vmatprep.subr.bf16.mxu0 0
    %985 = vmatpush1.bf16.msra.mxu0 0
    %986 = vmatprep.subr.bf16.mxu0 0
    %987 = vmatpush1.bf16.msra.mxu0 0
    %988 = vmatprep.subr.bf16.mxu0 0
    %989 = vmatpush1.bf16.msra.mxu0 0
    %990 = vmatprep.subr.bf16.mxu0 0
    %991 = vmatpush1.bf16.msra.mxu0 0
    %992 = vmatprep.subr.bf16.mxu0 0
    %993 = vmatpush1.bf16.msra.mxu0 0
    %994 = vmatprep.subr.bf16.mxu0 0
    %995 = vmatpush1.bf16.msra.mxu0 0
    %996 = vmatprep.subr.bf16.mxu0 0
    %997 = vmatpush1.bf16.msra.mxu0 0
    %998 = vmatprep.mubr.bf16.mxu0 0
    %999 = vmatmul.mubr.bf16.gmra.mrb[0].mxu0 %v894
    %v1000 = vpop.f32.mrb[0].mxu0
    %v1001 = vadd.f32 %v916, %v1000
    %v1002 = vpop.f32.mrb[0].mxu0
    %v1003 = vpop.f32.mrb[0].mxu0
    %v1004 = vadd.f32 %v916, %v1003
    %v1005 = vpop.f32.mrb[0].mxu0
    %1006 = vdwg.mxu0
    %v1007 = vmax.f32 %v1001, 0.0
    %v1008 = vmax.f32 %v1004, 0.0
    %v1009 = vpack.c.bf16 %v1008, %v1007
    %v1010 = vld [vmem:[#allocation23] sm:$0xf]
    %v1011 = vld [vmem:[#allocation23 + $0x4] sm:$0xf]
    %v1012 = vld [vmem:[#allocation23 + $0x8] sm:$0xf]
    %v1013 = vld [vmem:[#allocation23 + $0xc] sm:$0xf]
    %v1014 = vld [vmem:[#allocation23 + $0x10] sm:$0xf]
    %v1015 = vld [vmem:[#allocation23 + $0x14] sm:$0xf]
    %v1016 = vld [vmem:[#allocation23 + $0x18] sm:$0xf]
    %v1017 = vld [vmem:[#allocation23 + $0x1c] sm:$0xf]
    %v1018 = vld [vmem:[#allocation23 + $0x20] sm:$0xf]
    %v1019 = vld [vmem:[#allocation23 + $0x24] sm:$0xf]
    %v1020 = vld [vmem:[#allocation23 + $0x28] sm:$0xf]
    %v1021 = vld [vmem:[#allocation23 + $0x2c] sm:$0xf]
    %v1022 = vld [vmem:[#allocation23 + $0x30] sm:$0xf]
    %v1023 = vld [vmem:[#allocation23 + $0x34] sm:$0xf]
    %v1024 = vld [vmem:[#allocation23 + $0x38] sm:$0xf]
    %v1025 = vld [vmem:[#allocation23 + $0x3c] sm:$0xf]
    %v1026 = vld [vmem:[#allocation25] sm:$0x1]
    %v1028 = vlaneseq
    %v1029 = vshrl.u32 %v1028, 7
    %v1030 = vsub.s32 0, %v1029
    %v1031 = vrot.slane %v1026, %v1030
    %v1049 = vunpack.c.l.b16 %v1010
    %v1050 = vunpack.c.l.b16 %v1011
    %v1051 = vunpack.c.l.b16 %v1012
    %v1052 = vunpack.c.l.b16 %v1013
    %v1053 = vunpack.c.l.b16 %v1014
    %v1054 = vunpack.c.l.b16 %v1015
    %v1055 = vunpack.c.l.b16 %v1016
    %v1056 = vunpack.c.l.b16 %v1017
    %v1057 = vunpack.c.l.b16 %v1018
    %v1058 = vunpack.c.l.b16 %v1019
    %v1059 = vunpack.c.l.b16 %v1020
    %v1060 = vunpack.c.l.b16 %v1021
    %v1061 = vunpack.c.l.b16 %v1022
    %v1062 = vunpack.c.l.b16 %v1023
    %v1063 = vunpack.c.l.b16 %v1024
    %v1064 = vunpack.c.l.b16 %v1025
    %v1065 = vpack.c.b16 %v1050, %v1049
    %v1066 = vpack.c.b16 %v1052, %v1051
    %v1067 = vpack.c.b16 %v1054, %v1053
    %v1068 = vpack.c.b16 %v1056, %v1055
    %v1069 = vpack.c.b16 %v1058, %v1057
    %v1070 = vpack.c.b16 %v1060, %v1059
    %v1071 = vpack.c.b16 %v1062, %v1061
    %v1072 = vpack.c.b16 %v1064, %v1063
    %1081 = vmatprep.subr.bf16.mxu0 0
    %1082 = vmatpush1.bf16.msra.mxu0 %v1065
    %1083 = vmatprep.subr.bf16.mxu0 0
    %1084 = vmatpush1.bf16.msra.mxu0 %v1066
    %1085 = vmatprep.subr.bf16.mxu0 0
    %1086 = vmatpush1.bf16.msra.mxu0 %v1067
    %1087 = vmatprep.subr.bf16.mxu0 0
    %1088 = vmatpush1.bf16.msra.mxu0 %v1068
    %1089 = vmatprep.subr.bf16.mxu0 0
    %1090 = vmatpush1.bf16.msra.mxu0 %v1069
    %1091 = vmatprep.subr.bf16.mxu0 0
    %1092 = vmatpush1.bf16.msra.mxu0 %v1070
    %1093 = vmatprep.subr.bf16.mxu0 0
    %1094 = vmatpush1.bf16.msra.mxu0 %v1071
    %1095 = vmatprep.subr.bf16.mxu0 0
    %1096 = vmatpush1.bf16.msra.mxu0 %v1072
    %1097 = vmatprep.subr.bf16.mxu0 0
    %1098 = vmatpush1.bf16.msra.mxu0 0
    %1099 = vmatprep.subr.bf16.mxu0 0
    %1100 = vmatpush1.bf16.msra.mxu0 0
    %1101 = vmatprep.subr.bf16.mxu0 0
    %1102 = vmatpush1.bf16.msra.mxu0 0
    %1103 = vmatprep.subr.bf16.mxu0 0
    %1104 = vmatpush1.bf16.msra.mxu0 0
    %1105 = vmatprep.subr.bf16.mxu0 0
    %1106 = vmatpush1.bf16.msra.mxu0 0
    %1107 = vmatprep.subr.bf16.mxu0 0
    %1108 = vmatpush1.bf16.msra.mxu0 0
    %1109 = vmatprep.subr.bf16.mxu0 0
    %1110 = vmatpush1.bf16.msra.mxu0 0
    %1111 = vmatprep.subr.bf16.mxu0 0
    %1112 = vmatpush1.bf16.msra.mxu0 0
    %1113 = vmatprep.mubr.bf16.mxu0 0
    %1114 = vmatmul.mubr.bf16.gmra.mrb[0].mxu0 %v1009
    %v1115 = vpop.f32.mrb[0].mxu0
    %v1116 = vadd.f32 %v1031, %v1115
    %v1117 = vpop.f32.mrb[0].mxu0
    %v1118 = vpop.f32.mrb[0].mxu0
    %v1119 = vadd.f32 %v1031, %v1118
    %v1120 = vpop.f32.mrb[0].mxu0
    %1121 = vdwg.mxu0
    %v1122 = vmax.f32 %v1116, 0.0
    %v1123 = vmax.f32 %v1119, 0.0
    %v1124 = vpack.c.bf16 %v1123, %v1122
    %v1125 = vld [vmem:[#allocation26] sm:$0xf]
    %v1126 = vld [vmem:[#allocation26 + $0x4] sm:$0xf]
    %v1127 = vld [vmem:[#allocation26 + $0x8] sm:$0xf]
    %v1128 = vld [vmem:[#allocation26 + $0xc] sm:$0xf]
    %v1129 = vld [vmem:[#allocation26 + $0x10] sm:$0xf]
    %v1130 = vld [vmem:[#allocation26 + $0x14] sm:$0xf]
    %v1131 = vld [vmem:[#allocation26 + $0x18] sm:$0xf]
    %v1132 = vld [vmem:[#allocation26 + $0x1c] sm:$0xf]
    %v1133 = vld [vmem:[#allocation26 + $0x20] sm:$0xf]
    %v1134 = vld [vmem:[#allocation26 + $0x24] sm:$0xf]
    %v1135 = vld [vmem:[#allocation26 + $0x28] sm:$0xf]
    %v1136 = vld [vmem:[#allocation26 + $0x2c] sm:$0xf]
    %v1137 = vld [vmem:[#allocation26 + $0x30] sm:$0xf]
    %v1138 = vld [vmem:[#allocation26 + $0x34] sm:$0xf]
    %v1139 = vld [vmem:[#allocation26 + $0x38] sm:$0xf]
    %v1140 = vld [vmem:[#allocation26 + $0x3c] sm:$0xf]
    %v1141 = vld [vmem:[#allocation28] sm:$0x1]
    %v1143 = vlaneseq
    %v1144 = vshrl.u32 %v1143, 7
    %v1145 = vsub.s32 0, %v1144
    %v1146 = vrot.slane %v1141, %v1145
    %v1164 = vunpack.c.l.b16 %v1125
    %v1165 = vunpack.c.l.b16 %v1126
    %v1166 = vunpack.c.l.b16 %v1127
    %v1167 = vunpack.c.l.b16 %v1128
    %v1168 = vunpack.c.l.b16 %v1129
    %v1169 = vunpack.c.l.b16 %v1130
    %v1170 = vunpack.c.l.b16 %v1131
    %v1171 = vunpack.c.l.b16 %v1132
    %v1172 = vunpack.c.l.b16 %v1133
    %v1173 = vunpack.c.l.b16 %v1134
    %v1174 = vunpack.c.l.b16 %v1135
    %v1175 = vunpack.c.l.b16 %v1136
    %v1176 = vunpack.c.l.b16 %v1137
    %v1177 = vunpack.c.l.b16 %v1138
    %v1178 = vunpack.c.l.b16 %v1139
    %v1179 = vunpack.c.l.b16 %v1140
    %v1180 = vpack.c.b16 %v1165, %v1164
    %v1181 = vpack.c.b16 %v1167, %v1166
    %v1182 = vpack.c.b16 %v1169, %v1168
    %v1183 = vpack.c.b16 %v1171, %v1170
    %v1184 = vpack.c.b16 %v1173, %v1172
    %v1185 = vpack.c.b16 %v1175, %v1174
    %v1186 = vpack.c.b16 %v1177, %v1176
    %v1187 = vpack.c.b16 %v1179, %v1178
    %1196 = vmatprep.subr.bf16.mxu0 0
    %1197 = vmatpush1.bf16.msra.mxu0 %v1180
    %1198 = vmatprep.subr.bf16.mxu0 0
    %1199 = vmatpush1.bf16.msra.mxu0 %v1181
    %1200 = vmatprep.subr.bf16.mxu0 0
    %1201 = vmatpush1.bf16.msra.mxu0 %v1182
    %1202 = vmatprep.subr.bf16.mxu0 0
    %1203 = vmatpush1.bf16.msra.mxu0 %v1183
    %1204 = vmatprep.subr.bf16.mxu0 0
    %1205 = vmatpush1.bf16.msra.mxu0 %v1184
    %1206 = vmatprep.subr.bf16.mxu0 0
    %1207 = vmatpush1.bf16.msra.mxu0 %v1185
    %1208 = vmatprep.subr.bf16.mxu0 0
    %1209 = vmatpush1.bf16.msra.mxu0 %v1186
    %1210 = vmatprep.subr.bf16.mxu0 0
    %1211 = vmatpush1.bf16.msra.mxu0 %v1187
    %1212 = vmatprep.subr.bf16.mxu0 0
    %1213 = vmatpush1.bf16.msra.mxu0 0
    %1214 = vmatprep.subr.bf16.mxu0 0
    %1215 = vmatpush1.bf16.msra.mxu0 0
    %1216 = vmatprep.subr.bf16.mxu0 0
    %1217 = vmatpush1.bf16.msra.mxu0 0
    %1218 = vmatprep.subr.bf16.mxu0 0
    %1219 = vmatpush1.bf16.msra.mxu0 0
    %1220 = vmatprep.subr.bf16.mxu0 0
    %1221 = vmatpush1.bf16.msra.mxu0 0
    %1222 = vmatprep.subr.bf16.mxu0 0
    %1223 = vmatpush1.bf16.msra.mxu0 0
    %1224 = vmatprep.subr.bf16.mxu0 0
    %1225 = vmatpush1.bf16.msra.mxu0 0
    %1226 = vmatprep.subr.bf16.mxu0 0
    %1227 = vmatpush1.bf16.msra.mxu0 0
    %1228 = vmatprep.mubr.bf16.mxu0 0
    %1229 = vmatmul.mubr.bf16.gmra.mrb[0].mxu0 %v1124
    %v1230 = vpop.f32.mrb[0].mxu0
    %v1231 = vadd.f32 %v1146, %v1230
    %v1232 = vpop.f32.mrb[0].mxu0
    %v1233 = vpop.f32.mrb[0].mxu0
    %v1234 = vadd.f32 %v1146, %v1233
    %v1235 = vpop.f32.mrb[0].mxu0
    %1236 = vdwg.mxu0
    %v1237 = vmax.f32 %v1231, 0.0
    %v1238 = vmax.f32 %v1234, 0.0
    %v1239 = vpack.c.bf16 %v1238, %v1237
    %v1240 = vld [vmem:[%s17] sm:$0xf]
    %v1241 = vld [vmem:[%s17 + $0x4] sm:$0xf]
    %v1242 = vld [vmem:[%s17 + $0x8] sm:$0xf]
    %v1243 = vld [vmem:[%s17 + $0xc] sm:$0xf]
    %v1244 = vld [vmem:[%s17 + $0x10] sm:$0xf]
    %v1245 = vld [vmem:[%s17 + $0x14] sm:$0xf]
    %v1246 = vld [vmem:[%s17 + $0x18] sm:$0xf]
    %v1247 = vld [vmem:[%s17 + $0x1c] sm:$0xf]
    %v1248 = vld [vmem:[%s17 + $0x20] sm:$0xf]
    %v1249 = vld [vmem:[%s17 + $0x24] sm:$0xf]
    %v1250 = vld [vmem:[%s17 + $0x28] sm:$0xf]
    %v1251 = vld [vmem:[%s17 + $0x2c] sm:$0xf]
    %v1252 = vld [vmem:[%s17 + $0x30] sm:$0xf]
    %v1253 = vld [vmem:[%s17 + $0x34] sm:$0xf]
    %v1254 = vld [vmem:[%s17 + $0x38] sm:$0xf]
    %v1255 = vld [vmem:[%s17 + $0x3c] sm:$0xf]
    %v1256 = vld [vmem:[%s18] sm:$0x1]
    %v1258 = vlaneseq
    %v1259 = vshrl.u32 %v1258, 7
    %v1260 = vsub.s32 0, %v1259
    %v1261 = vrot.slane %v1256, %v1260
    %v1279 = vunpack.c.l.b16 %v1240
    %v1280 = vunpack.c.l.b16 %v1241
    %v1281 = vunpack.c.l.b16 %v1242
    %v1282 = vunpack.c.l.b16 %v1243
    %v1283 = vunpack.c.l.b16 %v1244
    %v1284 = vunpack.c.l.b16 %v1245
    %v1285 = vunpack.c.l.b16 %v1246
    %v1286 = vunpack.c.l.b16 %v1247
    %v1287 = vunpack.c.l.b16 %v1248
    %v1288 = vunpack.c.l.b16 %v1249
    %v1289 = vunpack.c.l.b16 %v1250
    %v1290 = vunpack.c.l.b16 %v1251
    %v1291 = vunpack.c.l.b16 %v1252
    %v1292 = vunpack.c.l.b16 %v1253
    %v1293 = vunpack.c.l.b16 %v1254
    %v1294 = vunpack.c.l.b16 %v1255
    %v1295 = vpack.c.b16 %v1280, %v1279
    %v1296 = vpack.c.b16 %v1282, %v1281
    %v1297 = vpack.c.b16 %v1284, %v1283
    %v1298 = vpack.c.b16 %v1286, %v1285
    %v1299 = vpack.c.b16 %v1288, %v1287
    %v1300 = vpack.c.b16 %v1290, %v1289
    %v1301 = vpack.c.b16 %v1292, %v1291
    %v1302 = vpack.c.b16 %v1294, %v1293
    %1311 = vmatprep.subr.bf16.mxu0 0
    %1312 = vmatpush1.bf16.msra.mxu0 %v1295
    %1313 = vmatprep.subr.bf16.mxu0 0
    %1314 = vmatpush1.bf16.msra.mxu0 %v1296
    %1315 = vmatprep.subr.bf16.mxu0 0
    %1316 = vmatpush1.bf16.msra.mxu0 %v1297
    %1317 = vmatprep.subr.bf16.mxu0 0
    %1318 = vmatpush1.bf16.msra.mxu0 %v1298
    %1319 = vmatprep.subr.bf16.mxu0 0
    %1320 = vmatpush1.bf16.msra.mxu0 %v1299
    %1321 = vmatprep.subr.bf16.mxu0 0
    %1322 = vmatpush1.bf16.msra.mxu0 %v1300
    %1323 = vmatprep.subr.bf16.mxu0 0
    %1324 = vmatpush1.bf16.msra.mxu0 %v1301
    %1325 = vmatprep.subr.bf16.mxu0 0
    %1326 = vmatpush1.bf16.msra.mxu0 %v1302
    %1327 = vmatprep.subr.bf16.mxu0 0
    %1328 = vmatpush1.bf16.msra.mxu0 0
    %1329 = vmatprep.subr.bf16.mxu0 0
    %1330 = vmatpush1.bf16.msra.mxu0 0
    %1331 = vmatprep.subr.bf16.mxu0 0
    %1332 = vmatpush1.bf16.msra.mxu0 0
    %1333 = vmatprep.subr.bf16.mxu0 0
    %1334 = vmatpush1.bf16.msra.mxu0 0
    %1335 = vmatprep.subr.bf16.mxu0 0
    %1336 = vmatpush1.bf16.msra.mxu0 0
    %1337 = vmatprep.subr.bf16.mxu0 0
    %1338 = vmatpush1.bf16.msra.mxu0 0
    %1339 = vmatprep.subr.bf16.mxu0 0
    %1340 = vmatpush1.bf16.msra.mxu0 0
    %1341 = vmatprep.subr.bf16.mxu0 0
    %1342 = vmatpush1.bf16.msra.mxu0 0
    %1343 = vmatprep.mubr.bf16.mxu0 0
    %1344 = vmatmul.mubr.bf16.gmra.mrb[0].mxu0 %v1239
    %v1345 = vpop.f32.mrb[0].mxu0
    %v1346 = vadd.f32 %v1261, %v1345
    %v1347 = vpop.f32.mrb[0].mxu0
    %v1348 = vpop.f32.mrb[0].mxu0
    %v1349 = vadd.f32 %v1261, %v1348
    %v1350 = vpop.f32.mrb[0].mxu0
    %1351 = vdwg.mxu0
    %v1352 = vmax.f32 %v1346, 0.0
    %v1353 = vmax.f32 %v1349, 0.0
    %v1354 = vpack.c.bf16 %v1353, %v1352
    %v1355 = vld [vmem:[#allocation29] sm:$0xf]
    %v1356 = vld [vmem:[#allocation29 + $0x4] sm:$0xf]
    %v1357 = vld [vmem:[#allocation29 + $0x8] sm:$0xf]
    %v1358 = vld [vmem:[#allocation29 + $0xc] sm:$0xf]
    %v1359 = vld [vmem:[#allocation29 + $0x10] sm:$0xf]
    %v1360 = vld [vmem:[#allocation29 + $0x14] sm:$0xf]
    %v1361 = vld [vmem:[#allocation29 + $0x18] sm:$0xf]
    %v1362 = vld [vmem:[#allocation29 + $0x1c] sm:$0xf]
    %v1363 = vld [vmem:[#allocation29 + $0x20] sm:$0xf]
    %v1364 = vld [vmem:[#allocation29 + $0x24] sm:$0xf]
    %v1365 = vld [vmem:[#allocation29 + $0x28] sm:$0xf]
    %v1366 = vld [vmem:[#allocation29 + $0x2c] sm:$0xf]
    %v1367 = vld [vmem:[#allocation29 + $0x30] sm:$0xf]
    %v1368 = vld [vmem:[#allocation29 + $0x34] sm:$0xf]
    %v1369 = vld [vmem:[#allocation29 + $0x38] sm:$0xf]
    %v1370 = vld [vmem:[#allocation29 + $0x3c] sm:$0xf]
    %v1371 = vld [vmem:[%s20] sm:$0x1]
    %v1373 = vlaneseq
    %v1374 = vshrl.u32 %v1373, 7
    %v1375 = vsub.s32 0, %v1374
    %v1376 = vrot.slane %v1371, %v1375
    %v1394 = vunpack.c.l.b16 %v1355
    %v1395 = vunpack.c.l.b16 %v1356
    %v1396 = vunpack.c.l.b16 %v1357
    %v1397 = vunpack.c.l.b16 %v1358
    %v1398 = vunpack.c.l.b16 %v1359
    %v1399 = vunpack.c.l.b16 %v1360
    %v1400 = vunpack.c.l.b16 %v1361
    %v1401 = vunpack.c.l.b16 %v1362
    %v1402 = vunpack.c.l.b16 %v1363
    %v1403 = vunpack.c.l.b16 %v1364
    %v1404 = vunpack.c.l.b16 %v1365
    %v1405 = vunpack.c.l.b16 %v1366
    %v1406 = vunpack.c.l.b16 %v1367
    %v1407 = vunpack.c.l.b16 %v1368
    %v1408 = vunpack.c.l.b16 %v1369
    %v1409 = vunpack.c.l.b16 %v1370
    %v1410 = vpack.c.b16 %v1395, %v1394
    %v1411 = vpack.c.b16 %v1397, %v1396
    %v1412 = vpack.c.b16 %v1399, %v1398
    %v1413 = vpack.c.b16 %v1401, %v1400
    %v1414 = vpack.c.b16 %v1403, %v1402
    %v1415 = vpack.c.b16 %v1405, %v1404
    %v1416 = vpack.c.b16 %v1407, %v1406
    %v1417 = vpack.c.b16 %v1409, %v1408
    %1426 = vmatprep.subr.bf16.mxu0 0
    %1427 = vmatpush1.bf16.msra.mxu0 %v1410
    %1428 = vmatprep.subr.bf16.mxu0 0
    %1429 = vmatpush1.bf16.msra.mxu0 %v1411
    %1430 = vmatprep.subr.bf16.mxu0 0
    %1431 = vmatpush1.bf16.msra.mxu0 %v1412
    %1432 = vmatprep.subr.bf16.mxu0 0
    %1433 = vmatpush1.bf16.msra.mxu0 %v1413
    %1434 = vmatprep.subr.bf16.mxu0 0
    %1435 = vmatpush1.bf16.msra.mxu0 %v1414
    %1436 = vmatprep.subr.bf16.mxu0 0
    %1437 = vmatpush1.bf16.msra.mxu0 %v1415
    %1438 = vmatprep.subr.bf16.mxu0 0
    %1439 = vmatpush1.bf16.msra.mxu0 %v1416
    %1440 = vmatprep.subr.bf16.mxu0 0
    %1441 = vmatpush1.bf16.msra.mxu0 %v1417
    %1442 = vmatprep.subr.bf16.mxu0 0
    %1443 = vmatpush1.bf16.msra.mxu0 0
    %1444 = vmatprep.subr.bf16.mxu0 0
    %1445 = vmatpush1.bf16.msra.mxu0 0
    %1446 = vmatprep.subr.bf16.mxu0 0
    %1447 = vmatpush1.bf16.msra.mxu0 0
    %1448 = vmatprep.subr.bf16.mxu0 0
    %1449 = vmatpush1.bf16.msra.mxu0 0
    %1450 = vmatprep.subr.bf16.mxu0 0
    %1451 = vmatpush1.bf16.msra.mxu0 0
    %1452 = vmatprep.subr.bf16.mxu0 0
    %1453 = vmatpush1.bf16.msra.mxu0 0
    %1454 = vmatprep.subr.bf16.mxu0 0
    %1455 = vmatpush1.bf16.msra.mxu0 0
    %1456 = vmatprep.subr.bf16.mxu0 0
    %1457 = vmatpush1.bf16.msra.mxu0 0
    %1458 = vmatprep.mubr.bf16.mxu0 0
    %1459 = vmatmul.mubr.bf16.gmra.mrb[0].mxu0 %v1354
    %v1460 = vpop.f32.mrb[0].mxu0
    %v1461 = vadd.f32 %v1376, %v1460
    %v1462 = vpop.f32.mrb[0].mxu0
    %v1463 = vpop.f32.mrb[0].mxu0
    %v1464 = vadd.f32 %v1376, %v1463
    %v1465 = vpop.f32.mrb[0].mxu0
    %1466 = vdwg.mxu0
    %v1467 = vmax.f32 %v1461, 0.0
    %v1468 = vmax.f32 %v1464, 0.0
    %v1469 = vpack.c.bf16 %v1468, %v1467
    %v1470 = vld [vmem:[#allocation31] sm:$0xf]
    %v1471 = vld [vmem:[#allocation31 + $0x4] sm:$0xf]
    %v1472 = vld [vmem:[#allocation31 + $0x8] sm:$0xf]
    %v1473 = vld [vmem:[#allocation31 + $0xc] sm:$0xf]
    %v1474 = vld [vmem:[#allocation31 + $0x10] sm:$0xf]
    %v1475 = vld [vmem:[#allocation31 + $0x14] sm:$0xf]
    %v1476 = vld [vmem:[#allocation31 + $0x18] sm:$0xf]
    %v1477 = vld [vmem:[#allocation31 + $0x1c] sm:$0xf]
    %v1478 = vld [vmem:[#allocation31 + $0x20] sm:$0xf]
    %v1479 = vld [vmem:[#allocation31 + $0x24] sm:$0xf]
    %v1480 = vld [vmem:[#allocation31 + $0x28] sm:$0xf]
    %v1481 = vld [vmem:[#allocation31 + $0x2c] sm:$0xf]
    %v1482 = vld [vmem:[#allocation31 + $0x30] sm:$0xf]
    %v1483 = vld [vmem:[#allocation31 + $0x34] sm:$0xf]
    %v1484 = vld [vmem:[#allocation31 + $0x38] sm:$0xf]
    %v1485 = vld [vmem:[#allocation31 + $0x3c] sm:$0xf]
    %v1486 = vld [vmem:[%s22] sm:$0x1]
    %v1488 = vlaneseq
    %v1489 = vshrl.u32 %v1488, 7
    %v1490 = vsub.s32 0, %v1489
    %v1491 = vrot.slane %v1486, %v1490
    %v1509 = vunpack.c.l.b16 %v1470
    %v1510 = vunpack.c.l.b16 %v1471
    %v1511 = vunpack.c.l.b16 %v1472
    %v1512 = vunpack.c.l.b16 %v1473
    %v1513 = vunpack.c.l.b16 %v1474
    %v1514 = vunpack.c.l.b16 %v1475
    %v1515 = vunpack.c.l.b16 %v1476
    %v1516 = vunpack.c.l.b16 %v1477
    %v1517 = vunpack.c.l.b16 %v1478
    %v1518 = vunpack.c.l.b16 %v1479
    %v1519 = vunpack.c.l.b16 %v1480
    %v1520 = vunpack.c.l.b16 %v1481
    %v1521 = vunpack.c.l.b16 %v1482
    %v1522 = vunpack.c.l.b16 %v1483
    %v1523 = vunpack.c.l.b16 %v1484
    %v1524 = vunpack.c.l.b16 %v1485
    %v1525 = vpack.c.b16 %v1510, %v1509
    %v1526 = vpack.c.b16 %v1512, %v1511
    %v1527 = vpack.c.b16 %v1514, %v1513
    %v1528 = vpack.c.b16 %v1516, %v1515
    %v1529 = vpack.c.b16 %v1518, %v1517
    %v1530 = vpack.c.b16 %v1520, %v1519
    %v1531 = vpack.c.b16 %v1522, %v1521
    %v1532 = vpack.c.b16 %v1524, %v1523
    %1541 = vmatprep.subr.bf16.mxu0 0
    %1542 = vmatpush1.bf16.msra.mxu0 %v1525
    %1543 = vmatprep.subr.bf16.mxu0 0
    %1544 = vmatpush1.bf16.msra.mxu0 %v1526
    %1545 = vmatprep.subr.bf16.mxu0 0
    %1546 = vmatpush1.bf16.msra.mxu0 %v1527
    %1547 = vmatprep.subr.bf16.mxu0 0
    %1548 = vmatpush1.bf16.msra.mxu0 %v1528
    %1549 = vmatprep.subr.bf16.mxu0 0
    %1550 = vmatpush1.bf16.msra.mxu0 %v1529
    %1551 = vmatprep.subr.bf16.mxu0 0
    %1552 = vmatpush1.bf16.msra.mxu0 %v1530
    %1553 = vmatprep.subr.bf16.mxu0 0
    %1554 = vmatpush1.bf16.msra.mxu0 %v1531
    %1555 = vmatprep.subr.bf16.mxu0 0
    %1556 = vmatpush1.bf16.msra.mxu0 %v1532
    %1557 = vmatprep.subr.bf16.mxu0 0
    %1558 = vmatpush1.bf16.msra.mxu0 0
    %1559 = vmatprep.subr.bf16.mxu0 0
    %1560 = vmatpush1.bf16.msra.mxu0 0
    %1561 = vmatprep.subr.bf16.mxu0 0
    %1562 = vmatpush1.bf16.msra.mxu0 0
    %1563 = vmatprep.subr.bf16.mxu0 0
    %1564 = vmatpush1.bf16.msra.mxu0 0
    %1565 = vmatprep.subr.bf16.mxu0 0
    %1566 = vmatpush1.bf16.msra.mxu0 0
    %1567 = vmatprep.subr.bf16.mxu0 0
    %1568 = vmatpush1.bf16.msra.mxu0 0
    %1569 = vmatprep.subr.bf16.mxu0 0
    %1570 = vmatpush1.bf16.msra.mxu0 0
    %1571 = vmatprep.subr.bf16.mxu0 0
    %1572 = vmatpush1.bf16.msra.mxu0 0
    %1573 = vmatprep.mubr.bf16.mxu0 0
    %1574 = vmatmul.mubr.bf16.gmra.mrb[0].mxu0 %v1469
    %v1575 = vpop.f32.mrb[0].mxu0
    %v1576 = vadd.f32 %v1491, %v1575
    %v1577 = vpop.f32.mrb[0].mxu0
    %v1578 = vpop.f32.mrb[0].mxu0
    %v1579 = vadd.f32 %v1491, %v1578
    %v1580 = vpop.f32.mrb[0].mxu0
    %1581 = vdwg.mxu0
    %1582 = vst [vmem:[#allocation32] sm:$0xff] %v1576
    %1583 = vst [vmem:[#allocation32 + $0x8] sm:$0xff] %v1579
    // Predicated region
    $region170: #{tpu_custom_call.1} parent=1 // pred_check
      _
    $region171: #{tpu_custom_call.1} parent=1 // pred_check_branch
      %1585 = sbr.rel (0) target = $region173
    $region172: #{tpu_custom_call.1} parent=1 // pred_region
      %s1587 = ssub.s32 256, 256
      %1588 = vsyncadd [#allocation4], %s1587
      %s1589 = sshll.u32 [#allocation32], 4
      %s1590 = int_to_ptr.vmem [resolvable:$true] %s1589
      %1595 = dma.vmem_to_hbm [thread:$0]  %s1590, 256, %s23, [#allocation4], 128, 128, 8
    $region173: #{tpu_custom_call.1} parent=1 // pred_fallthru
      _
    // Predicated region
    $region174: #{tpu_custom_call.1} parent=1 // pred_check
      _
    $region175: #{tpu_custom_call.1} parent=1 // pred_check_branch
      %1597 = sbr.rel (0) target = $region177
    $region176: #{tpu_custom_call.1} parent=1 // pred_region
      %1598 = dma.done [#allocation4], 256
    $region177: #{tpu_custom_call.1} parent=1 // pred_fallthru
      _
    %1599 = vsyncpa [#allocation3], 1
    %1600 = vsyncpa [#allocation6], 1
    %1601 = vsyncpa [#allocation9], 1
    %1602 = vsyncpa [#allocation12], 1
    %1603 = vsyncpa [#allocation15], 1
    %1604 = vsyncpa [#allocation18], 1
    %1605 = vsyncpa [#allocation21], 1
    %1606 = vsyncpa [#allocation24], 1
    %1607 = vsyncpa [#allocation27], 1
    %1608 = vsyncpa [#allocation30], 1
    %1609 = vsyncpa [#allocation4], 1

</llo_original>
